<compile_context>
chip_gen: v7x
topology: tpu7x:2x2x1
jax: 0.10.0
libtpu: 0.0.40
codegen_flags: <defaults>
</compile_context>

<pallas_src>
import functools

import jax
import jax.numpy as jnp
from jax.experimental import pallas as pl
from jax.experimental.pallas import tpu as pltpu

PATH_LENGTH = 71                 # Path_length in the original source
PAD_PL = 128                     # lane-dense padded head width
_VMEM_LIMIT = 32 * 1024 * 1024   # fits v7x's 64 MiB/TC with headroom


# ----------------------------------------------------------------------------
# Pallas kernels
# ----------------------------------------------------------------------------
def _apply_act(y, act):
    if act == "relu":
        return jnp.maximum(y, 0.0)
    if act == "leaky":
        return jnp.where(y >= 0.0, y, 0.2 * y)
    if act == "sigmoid":
        return jax.nn.sigmoid(y)
    return y


def _mm_kernel(act, x_ref, w_ref, sc_ref, sh_ref, o_ref):
    # bf16 (tm,K)@(K,N) on the MXU, f32 accumulate, f32 BN epilogue + activation.
    y = jnp.dot(x_ref[...], w_ref[...], preferred_element_type=jnp.float32)
    y = y * sc_ref[...] + sh_ref[...]
    o_ref[...] = _apply_act(y, act).astype(o_ref.dtype)


def _mm_res_kernel(act, x_ref, w_ref, sc_ref, sh_ref, r_ref, o_ref):
    # Same + fused residual add (BasicBlock identity skip).
    y = jnp.dot(x_ref[...], w_ref[...], preferred_element_type=jnp.float32)
    y = y * sc_ref[...] + sh_ref[...] + r_ref[...].astype(jnp.float32)
    o_ref[...] = _apply_act(y, act).astype(o_ref.dtype)


def _mm_res_proj_kernel(act, x_ref, w_ref, sc_ref, sh_ref,
                        i_ref, wd_ref, sd_ref, hd_ref, o_ref):
    # Second BasicBlock GEMM with the downsample 1x1 conv + BN fused in:
    #   out = act( (x@W)*s+h + (identity@Wd)*sd+hd )
    y = jnp.dot(x_ref[...], w_ref[...], preferred_element_type=jnp.float32)
    y = y * sc_ref[...] + sh_ref[...]
    r = jnp.dot(i_ref[...], wd_ref[...], preferred_element_type=jnp.float32)
    r = r * sd_ref[...] + hd_ref[...]
    o_ref[...] = _apply_act(y + r, act).astype(o_ref.dtype)


def _head_kernel(f_ref, w1_ref, w2_ref, o_ref):
    # Fused classifier tail: fc(2048->2048pad) -> LeakyReLU(0.2) -> fc(->128pad)
    # -> Sigmoid.  Accumulation and activations in f32, MXU operands bf16.
    h = jnp.dot(f_ref[...], w1_ref[...], preferred_element_type=jnp.float32)
    h = jnp.where(h >= 0.0, h, 0.2 * h).astype(jnp.bfloat16)
    y = jnp.dot(h, w2_ref[...], preferred_element_type=jnp.float32)
    o_ref[...] = jax.nn.sigmoid(y)


def _reduce_kernel(op, x_ref, o_ref):
    # Reduce (tm, R, C) -> (tm, C) over the middle (sublane) axis.
    x = x_ref[...].astype(jnp.float32)
    if op == "max":
        acc = jnp.max(x, axis=1)
    else:
        acc = jnp.mean(x, axis=1)
    o_ref[...] = acc.astype(o_ref.dtype)


# ----------------------------------------------------------------------------
# Pallas wrappers
# ----------------------------------------------------------------------------
def _pick_tm(m):
    # Largest tile dividing M that still gives >=2 grid steps (megacore-friendly
    # on v7x, amortizes per-step overhead elsewhere); otherwise take the full M.
    for tm in (1024, 512, 256):
        if m % tm == 0 and m // tm >= 2:
            return tm
    return m


def fused_matmul(x, w, scale, shift, act="none", residual=None, proj=None,
                 out_dtype=jnp.bfloat16):
    """out = act((x @ w) * scale + shift [+ residual | + proj_bn(identity@Wd)])."""
    m, k = x.shape
    n = w.shape[1]
    tm = _pick_tm(m)
    grid = (m // tm,)
    sc2 = scale.reshape(1, n).astype(jnp.float32)
    sh2 = shift.reshape(1, n).astype(jnp.float32)

    in_specs = [
        pl.BlockSpec((tm, k), lambda i: (i, 0)),
        pl.BlockSpec((k, n), lambda i: (0, 0)),
        pl.BlockSpec((1, n), lambda i: (0, 0)),
        pl.BlockSpec((1, n), lambda i: (0, 0)),
    ]
    args = [x.astype(jnp.bfloat16), w.astype(jnp.bfloat16), sc2, sh2]

    if proj is not None:
        ident, wd, sd, hd = proj
        kd = wd.shape[0]
        in_specs += [
            pl.BlockSpec((tm, kd), lambda i: (i, 0)),
            pl.BlockSpec((kd, n), lambda i: (0, 0)),
            pl.BlockSpec((1, n), lambda i: (0, 0)),
            pl.BlockSpec((1, n), lambda i: (0, 0)),
        ]
        args += [ident.astype(jnp.bfloat16), wd.astype(jnp.bfloat16),
                 sd.reshape(1, n).astype(jnp.float32),
                 hd.reshape(1, n).astype(jnp.float32)]
        kernel = functools.partial(_mm_res_proj_kernel, act)
    elif residual is not None:
        in_specs.append(pl.BlockSpec((tm, n), lambda i: (i, 0)))
        args.append(residual.astype(jnp.bfloat16))
        kernel = functools.partial(_mm_res_kernel, act)
    else:
        kernel = functools.partial(_mm_kernel, act)

    return pl.pallas_call(
        kernel,
        out_shape=jax.ShapeDtypeStruct((m, n), out_dtype),
        grid=grid,
        in_specs=in_specs,
        out_specs=pl.BlockSpec((tm, n), lambda i: (i, 0)),
        compiler_params=pltpu.CompilerParams(
            dimension_semantics=("parallel",),
            vmem_limit_bytes=_VMEM_LIMIT,
        ),
    )(*args)


def pallas_reduce(x, op):
    """Reduce [M, R, C] -> [M, C] with max or mean, inside Pallas (bf16 in/out)."""
    m, r, c = x.shape
    tm = _pick_tm(m)
    grid = (m // tm,)
    return pl.pallas_call(
        functools.partial(_reduce_kernel, op),
        out_shape=jax.ShapeDtypeStruct((m, c), jnp.bfloat16),
        grid=grid,
        in_specs=[pl.BlockSpec((tm, r, c), lambda i: (i, 0, 0))],
        out_specs=pl.BlockSpec((tm, c), lambda i: (i, 0)),
        compiler_params=pltpu.CompilerParams(
            dimension_semantics=("parallel",),
            vmem_limit_bytes=_VMEM_LIMIT,
        ),
    )(x.astype(jnp.bfloat16))


def head_forward(feat, w1, w2):
    """Fused flatten-features -> fc(2048,2000pad) -> LeakyReLU -> fc(->71pad) -> Sigmoid."""
    m = feat.shape[0]
    k1, n1 = w1.shape
    n2 = w2.shape[1]
    return pl.pallas_call(
        _head_kernel,
        out_shape=jax.ShapeDtypeStruct((m, n2), jnp.float32),
        grid=(1,),
        in_specs=[
            pl.BlockSpec((m, k1), lambda i: (0, 0)),
            pl.BlockSpec((k1, n1), lambda i: (0, 0)),
            pl.BlockSpec((n1, n2), lambda i: (0, 0)),
        ],
        out_specs=pl.BlockSpec((m, n2), lambda i: (0, 0)),
        compiler_params=pltpu.CompilerParams(
            dimension_semantics=("arbitrary",),
            vmem_limit_bytes=_VMEM_LIMIT,
        ),
    )(feat.astype(jnp.bfloat16), w1.astype(jnp.bfloat16), w2.astype(jnp.bfloat16))


# ----------------------------------------------------------------------------
# Glue: im2col (bf16, no relayout), conv / pool helpers
# ----------------------------------------------------------------------------
def _im2col(x, k, stride, pad, pad_value=0.0):
    # Returns [N, oh, ow, k*k*C] by concatenating shifted slices along the lane
    # axis (no stack+reshape relayout); input is already bf16.
    n, h, w, c = x.shape
    out_h = (h + 2 * pad - k) // stride + 1
    out_w = (w + 2 * pad - k) // stride + 1
    xp = jnp.pad(x, ((0, 0), (pad, pad), (pad, pad), (0, 0)),
                 constant_values=pad_value)
    cols = []
    for dy in range(k):
        for dx in range(k):
            cols.append(xp[:, dy:dy + stride * out_h:stride,
                           dx:dx + stride * out_w:stride, :])
    patches = jnp.concatenate(cols, axis=-1)  # [N, oh, ow, k*k*C]
    return patches, out_h, out_w


def conv_bn_act(x, w, scale, shift, *, k, stride, pad, act,
                residual=None, proj=None):
    n, _, _, cin = x.shape
    cout = w.shape[1]
    patches, oh, ow = _im2col(x, k, stride, pad, 0.0)
    p2d = patches.reshape(n * oh * ow, k * k * cin)
    if w.shape[0] > p2d.shape[1]:  # lane-padded contraction (e.g. conv1 147->256)
        p2d = jnp.pad(p2d, ((0, 0), (0, w.shape[0] - p2d.shape[1])))
    y2d = fused_matmul(p2d, w, scale, shift, act=act,
                       residual=residual, proj=proj)
    return y2d.reshape(n, oh, ow, cout)


def maxpool_3x3_s2(x):
    n, _, _, c = x.shape
    neg = float(jnp.finfo(jnp.bfloat16).min)
    patches, oh, ow = _im2col(x, 3, 2, 1, pad_value=neg)
    p = patches.reshape(n * oh * ow, 9, c)
    y = pallas_reduce(p, "max")
    return y.reshape(n, oh, ow, c)


def adaptive_avgpool_2x2(x):
    n, h, w, c = x.shape
    if h == 2 and w == 2:
        return x  # AdaptiveAvgPool2d((2,2)) on a 2x2 map is the identity
    hb, wb = h // 2, w // 2  # matches PyTorch adaptive pooling when divisible
    xr = x.reshape(n, 2, hb, 2, wb, c)
    xr = jnp.transpose(xr, (0, 1, 3, 2, 4, 5)).reshape(n * 4, hb * wb, c)
    y = pallas_reduce(xr, "mean")
    return y.reshape(n, 2, 2, c)


def basic_block(x, bp):
    stride = bp["stride"]
    w1, s1, h1 = bp["conv1"]
    w2, s2, h2 = bp["conv2"]
    y = conv_bn_act(x, w1, s1, h1, k=3, stride=stride, pad=1, act="relu")
    n, oh, ow, cout = y.shape
    if "down" in bp:
        # Fuse the downsample 1x1 conv + BN into the second GEMM: the strided
        # identity is just a cheap strided slice (no im2col expansion).
        wd, sd, hd = bp["down"]
        ident2d = x[:, ::stride, ::stride, :].reshape(n * oh * ow, x.shape[-1])
        y = conv_bn_act(y, w2, s2, h2, k=3, stride=1, pad=1, act="relu",
                        proj=(ident2d, wd, sd, hd))
    else:
        res2d = x.reshape(n * oh * ow, cout)
        y = conv_bn_act(y, w2, s2, h2, k=3, stride=1, pad=1, act="relu",
                        residual=res2d)
    return y


# ----------------------------------------------------------------------------
# Deterministic parameter init (synthetic; the original loads a .pth checkpoint)
# ----------------------------------------------------------------------------
def _bn_fold(key, c):
    kg, kb, km, kv = jax.random.split(key, 4)
    gamma = 1.0 + 0.1 * jax.random.normal(kg, (c,), jnp.float32)
    beta = 0.1 * jax.random.normal(kb, (c,), jnp.float32)
    mean = 0.1 * jax.random.normal(km, (c,), jnp.float32)
    var = 0.5 + jax.random.uniform(kv, (c,), jnp.float32)
    scale = gamma / jnp.sqrt(var + 1e-5)
    shift = beta - mean * scale
    return scale, shift


def _conv_bn_init(key, cin, cout, k, pad_k_to=None):
    kw, kbn = jax.random.split(key)
    fan_in = k * k * cin
    w = jax.random.normal(kw, (fan_in, cout), jnp.float32) * (2.0 / fan_in) ** 0.5
    if pad_k_to is not None and pad_k_to > fan_in:
        w = jnp.pad(w, ((0, pad_k_to - fan_in), (0, 0)))
    scale, shift = _bn_fold(kbn, cout)
    return (w.astype(jnp.bfloat16), scale, shift)


def init_params(key):
    keys = iter(jax.random.split(key, 32))
    # conv1: 7x7x3 -> 64; contraction 147 zero-padded to a lane-dense 256.
    p = {"conv1": _conv_bn_init(next(keys), 3, 64, 7, pad_k_to=256)}
    stage_specs = [
        (64, 64, [1, 1]),
        (64, 128, [2, 1]),
        (128, 256, [2, 1]),
        (256, 512, [2, 1]),
    ]
    blocks = []
    for cin, cout, strides in stage_specs:
        for bidx, s in enumerate(strides):
            in_c = cin if bidx == 0 else cout
            bp = {
                "conv1": _conv_bn_init(next(keys), in_c, cout, 3),
                "conv2": _conv_bn_init(next(keys), cout, cout, 3),
                "stride": s,
            }
            if s != 1 or in_c != cout:
                bp["down"] = _conv_bn_init(next(keys), in_c, cout, 1)
            blocks.append(bp)
    p["blocks"] = blocks
    # resnet.fc replaced with Linear(512*4, 2000, bias=False); padded 2000->2048.
    w_fc1 = jax.random.normal(next(keys), (512 * 4, 2000), jnp.float32) * 0.02
    p["fc_resnet"] = jnp.pad(w_fc1, ((0, 0), (0, 2048 - 2000))).astype(jnp.bfloat16)
    # layers[2] replaced with Linear(2000, Path_length, bias=False); padded to
    # (2048, 128) with zero rows/cols so results are identical after slicing.
    w_fc2 = jax.random.normal(next(keys), (2000, PATH_LENGTH), jnp.float32) * 0.02
    p["fc_head"] = jnp.pad(
        w_fc2, ((0, 2048 - 2000), (0, PAD_PL - PATH_LENGTH))).astype(jnp.bfloat16)
    return p


# ----------------------------------------------------------------------------
# Forward pass: resnet18 -> LeakyReLU(0.2) -> Linear(2000, PL) -> Sigmoid
# ----------------------------------------------------------------------------
def netd_resnet_forward(params, x_nchw):
    x = jnp.transpose(x_nchw, (0, 2, 3, 1)).astype(jnp.bfloat16)  # NCHW -> NHWC

    w, sc, sh = params["conv1"]
    x = conv_bn_act(x, w, sc, sh, k=7, stride=2, pad=3, act="relu")
    x = maxpool_3x3_s2(x)

    for bp in params["blocks"]:
        x = basic_block(x, bp)

    x = adaptive_avgpool_2x2(x)                 # [N, 2, 2, 512]
    n = x.shape[0]
    # torch.flatten(x, 1) on NCHW (N, 512, 2, 2) -> channel-major flatten
    feat = jnp.transpose(x, (0, 3, 1, 2)).reshape(n, 512 * 4)

    # Fused: resnet.fc + LeakyReLU(0.2) + Linear(2000, PL) + Sigmoid (one kernel)
    out_padded = head_forward(feat, params["fc_resnet"], params["fc_head"])
    return out_padded[:, :PATH_LENGTH]


# ----------------------------------------------------------------------------
if __name__ == "__main__":
    key = jax.random.PRNGKey(0)
    pkey, xkey = jax.random.split(key)
    params = init_params(pkey)

    # Small input consistent with the module: NCHW, 3 channels, 64x64 spatial
    # (divisible by the network's total stride of 32 -> 2x2 final feature map).
    x = jax.random.normal(xkey, (2, 3, 64, 64), jnp.float32)

    out = netd_resnet_forward(params, x)
    out = jax.block_until_ready(out)

    assert out.shape == (2, PATH_LENGTH), out.shape
    assert bool(jnp.all(out >= 0.0)) and bool(jnp.all(out <= 1.0))
    print("KERNEL_OK")
</pallas_src>

<mosaic_0001>
module attributes {stable_mosaic.version = 11 : i64} {
  func.func @_mm_kernel(%arg0: i32, %arg1: memref<1024x256xbf16, #tpu.memory_space<vmem>>, %arg2: memref<256x64xbf16, #tpu.memory_space<vmem>>, %arg3: memref<1x64xf32, #tpu.memory_space<vmem>>, %arg4: memref<1x64xf32, #tpu.memory_space<vmem>>, %arg5: memref<1024x64xbf16, #tpu.memory_space<vmem>>) attributes {dimension_semantics = [#tpu.dimension_semantics<parallel>], iteration_bounds = array<i64: 2>, scalar_prefetch = 0 : i64, scratch_operands = 0 : i64, tpu.core_type = #tpu.core_type<tc>, window_params = [{transform_indices = @transform_0, window_bounds = array<i64: 1024, 256>}, {pipeline_mode = #tpu.pipeline_mode<synchronous>, transform_indices = @transform_1, window_bounds = array<i64: 256, 64>}, {pipeline_mode = #tpu.pipeline_mode<synchronous>, transform_indices = @transform_2, window_bounds = array<i64: 1, 64>}, {pipeline_mode = #tpu.pipeline_mode<synchronous>, transform_indices = @transform_3, window_bounds = array<i64: 1, 64>}, {transform_indices = @transform_4, window_bounds = array<i64: 1024, 64>}]} {
    %c0 = arith.constant 0 : index
    %c0_0 = arith.constant 0 : index
    %0 = vector.load %arg1[%c0, %c0_0] : memref<1024x256xbf16, #tpu.memory_space<vmem>>, vector<1024x256xbf16>
    %c0_1 = arith.constant 0 : index
    %c0_2 = arith.constant 0 : index
    %1 = vector.load %arg2[%c0_1, %c0_2] : memref<256x64xbf16, #tpu.memory_space<vmem>>, vector<256x64xbf16>
    %cst = arith.constant dense<0.000000e+00> : vector<1024x64xf32>
    %2 = tpu.matmul %0, %1, %cst {dimension_numbers = #tpu.dot_dimension_numbers<[1], [0], [0], [1], [0, 0, 1, 1], [], []>} : vector<1024x256xbf16>, vector<256x64xbf16>, vector<1024x64xf32> -> vector<1024x64xf32>
    %c0_3 = arith.constant 0 : index
    %c0_4 = arith.constant 0 : index
    %3 = vector.load %arg3[%c0_3, %c0_4] : memref<1x64xf32, #tpu.memory_space<vmem>>, vector<1x64xf32>
    %4 = vector.broadcast %3 : vector<1x64xf32> to vector<1024x64xf32>
    %5 = arith.mulf %2, %4 : vector<1024x64xf32>
    %c0_5 = arith.constant 0 : index
    %c0_6 = arith.constant 0 : index
    %6 = vector.load %arg4[%c0_5, %c0_6] : memref<1x64xf32, #tpu.memory_space<vmem>>, vector<1x64xf32>
    %7 = vector.broadcast %6 : vector<1x64xf32> to vector<1024x64xf32>
    %8 = arith.addf %5, %7 : vector<1024x64xf32>
    %cst_7 = arith.constant 0.000000e+00 : f32
    %9 = vector.broadcast %cst_7 : f32 to vector<1024x64xf32>
    %10 = arith.maximumf %8, %9 : vector<1024x64xf32>
    %11 = arith.truncf %10 : vector<1024x64xf32> to vector<1024x64xbf16>
    %c0_8 = arith.constant 0 : index
    %c0_9 = arith.constant 0 : index
    %12 = vector.load %arg5[%c0_8, %c0_9] : memref<1024x64xbf16, #tpu.memory_space<vmem>>, vector<1024x64xbf16>
    tpu.vector_store %arg5[%c0_8, %c0_9], %11 {strides = array<i32>} : memref<1024x64xbf16, #tpu.memory_space<vmem>>, vector<1024x64xbf16>,
    return
  }
  func.func @transform_0(%arg0: i32) -> (i32, i32) {
    %c0_i32 = arith.constant 0 : i32
    %c0_i32_0 = arith.constant 0 : i32
    return %arg0, %c0_i32 : i32, i32
  }
  func.func @transform_1(%arg0: i32) -> (i32, i32) {
    %c0_i32 = arith.constant 0 : i32
    %c0_i32_0 = arith.constant 0 : i32
    %c0_i32_1 = arith.constant 0 : i32
    return %c0_i32, %c0_i32_0 : i32, i32
  }
  func.func @transform_2(%arg0: i32) -> (i32, i32) {
    %c0_i32 = arith.constant 0 : i32
    %c0_i32_0 = arith.constant 0 : i32
    %c0_i32_1 = arith.constant 0 : i32
    return %c0_i32, %c0_i32_0 : i32, i32
  }
  func.func @transform_3(%arg0: i32) -> (i32, i32) {
    %c0_i32 = arith.constant 0 : i32
    %c0_i32_0 = arith.constant 0 : i32
    %c0_i32_1 = arith.constant 0 : i32
    return %c0_i32, %c0_i32_0 : i32, i32
  }
  func.func @transform_4(%arg0: i32) -> (i32, i32) {
    %c0_i32 = arith.constant 0 : i32
    %c0_i32_0 = arith.constant 0 : i32
    return %arg0, %c0_i32 : i32, i32
  }
}

</mosaic_0001>

<llo_original>
// kernel: tpu_custom_call.1
$region0: #{tpu_custom_call.1}
  #allocation0 [shape = 'u32[]', space=smem, size = 0x4, offset = 0x4, fixed_abs, tag = 'smem constant byte address 0x4 - core index']
  #allocation1 [shape = 'u32[144,128]{1,0:T(1,128)}', space=vmem, size = 0x12000, scoped, tag = 'internal scratch']
  %s0 = inlined_call_operand.hbm [shape: bf16[2048,256], index: 0, kind: input, shape index: {}]
  %s1 = inlined_call_operand.vmem [shape: bf16[256,64], index: 1, kind: input, shape index: {}]
  %s2 = inlined_call_operand.vmem [shape: f32[1,64], index: 2, kind: input, shape index: {}]
  %s3 = inlined_call_operand.vmem [shape: f32[1,64], index: 3, kind: input, shape index: {}]
  %s4 = inlined_call_operand.vmem [shape: bf16[2048,64], index: 4, kind: output, shape index: {}]
  %s5 = sld [smem:[#allocation0]]
  $region53: #{tpu_custom_call.1} parent=0
    _
  %s7 = ssub.s32 1, %s5
  %s8 = scalar_select 0, %s7, %s5
  $region1: #{tpu_custom_call.1} parent=0
    #allocation2 [shape = 'u8[1048576]{0}', space=vmem, size = 0x100000, scoped, tag = 'input window, operand 0']
    #allocation3 [shape = 's32[2]{0}', space=sflag, size = 0x8, scoped, tag = 'scoped memory for tpu_custom_call.1']
    %9 = vsyncpa [#allocation3], 0
    %s10 = scalar_lea.sflag [#allocation3], 1
    %11 = vsyncpa %s10, 0
    loop: start=0, step=1, limit=4
    $region2: #{tpu_custom_call.1} parent=1 // loop_pre_header
      _
    $region3: #{tpu_custom_call.1} parent=1 // loop_header
      %s13 = sphi 0, %s17
      %p14 = scmp.ge.s32.totalorder %s13, 4
      %s23 = sphi 0, %s25
      %s26 = sphi 0, %s23
      %s27 = sphi 0, %s26
      %s43 = sphi 0, %s27
      %s47 = sphi 0, %s47
      %s49 = sphi 0, %s47
      %s50 = sphi 0, %s49
      %s64 = sphi 0, %s50
      %s68 = sphi 0, %s68
      %s70 = sphi 0, %s68
      %s71 = sphi 0, %s70
      %s85 = sphi 0, %s71
      %s89 = sphi 0, %s89
      %s91 = sphi 0, %s89
      %s92 = sphi 0, %s91
      %s106 = sphi 0, %s92
      %s112 = sphi 0, %s114
      %s115 = sphi 0, %s112
      %s116 = sphi 0, %s115
      %s132 = sphi 0, %s116
    $region4: #{tpu_custom_call.1} parent=1 // loop_header_branch
      %16 = sbr.rel (%p14) target = $region8
    $region5: #{tpu_custom_call.1} parent=1 // loop_body
      %s18 = ssub.s32 %s13, 1
      %s19 = ssub.s32 %s13, 2
      %s20 = sadd.s32 %s13, 1
      %s21 = ssub.s32 %s13, %s20
      %p22 = scmp.eq.s32.totalorder %s21, 0
      %s24 = sadd.s32 %s23, 1
      %s25 = scalar_select %p22, %s23, %s24
      %p28 = pneg %p22
      %p29 = scmp.eq.s32.totalorder %s13, 1
      %p30 = por %p28, %p29
      %p31 = scmp.ne.s32.totalorder %s23, %s26
      %p32 = scmp.eq.s32.totalorder %s13, 0
      %p33 = por %p31, %p32
      %p34 = scmp.ne.s32.totalorder %s23, %s26
      %p35 = scmp.eq.s32.totalorder %s18, 1
      %p36 = por %p34, %p35
      %p37 = scmp.ne.s32.totalorder %s26, %s27
      %p38 = scmp.eq.s32.totalorder %s18, 0
      %p39 = por %p37, %p38
      %p40 = scmp.ne.s32.totalorder %s26, %s27
      %p41 = scmp.eq.s32.totalorder %s19, 1
      %p42 = por %p40, %p41
      %p44 = scmp.ne.s32.totalorder %s27, %s43
      %p45 = scmp.eq.s32.totalorder %s19, 0
      %p46 = por %p44, %p45
      %s48 = sadd.s32 %s47, 1
      %p51 = scmp.eq.s32.totalorder %s13, 1
      %p52 = scmp.ne.s32.totalorder %s47, %s49
      %p53 = scmp.eq.s32.totalorder %s13, 0
      %p54 = por %p52, %p53
      %p55 = scmp.ne.s32.totalorder %s47, %s49
      %p56 = scmp.eq.s32.totalorder %s18, 1
      %p57 = por %p55, %p56
      %p58 = scmp.ne.s32.totalorder %s49, %s50
      %p59 = scmp.eq.s32.totalorder %s18, 0
      %p60 = por %p58, %p59
      %p61 = scmp.ne.s32.totalorder %s49, %s50
      %p62 = scmp.eq.s32.totalorder %s19, 1
      %p63 = por %p61, %p62
      %p65 = scmp.ne.s32.totalorder %s50, %s64
      %p66 = scmp.eq.s32.totalorder %s19, 0
      %p67 = por %p65, %p66
      %s69 = sadd.s32 %s68, 1
      %p72 = scmp.eq.s32.totalorder %s13, 1
      %p73 = scmp.ne.s32.totalorder %s68, %s70
      %p74 = scmp.eq.s32.totalorder %s13, 0
      %p75 = por %p73, %p74
      %p76 = scmp.ne.s32.totalorder %s68, %s70
      %p77 = scmp.eq.s32.totalorder %s18, 1
      %p78 = por %p76, %p77
      %p79 = scmp.ne.s32.totalorder %s70, %s71
      %p80 = scmp.eq.s32.totalorder %s18, 0
      %p81 = por %p79, %p80
      %p82 = scmp.ne.s32.totalorder %s70, %s71
      %p83 = scmp.eq.s32.totalorder %s19, 1
      %p84 = por %p82, %p83
      %p86 = scmp.ne.s32.totalorder %s71, %s85
      %p87 = scmp.eq.s32.totalorder %s19, 0
      %p88 = por %p86, %p87
      %s90 = sadd.s32 %s89, 1
      %p93 = scmp.eq.s32.totalorder %s13, 1
      %p94 = scmp.ne.s32.totalorder %s89, %s91
      %p95 = scmp.eq.s32.totalorder %s13, 0
      %p96 = por %p94, %p95
      %p97 = scmp.ne.s32.totalorder %s89, %s91
      %p98 = scmp.eq.s32.totalorder %s18, 1
      %p99 = por %p97, %p98
      %p100 = scmp.ne.s32.totalorder %s91, %s92
      %p101 = scmp.eq.s32.totalorder %s18, 0
      %p102 = por %p100, %p101
      %p103 = scmp.ne.s32.totalorder %s91, %s92
      %p104 = scmp.eq.s32.totalorder %s19, 1
      %p105 = por %p103, %p104
      %p107 = scmp.ne.s32.totalorder %s92, %s106
      %p108 = scmp.eq.s32.totalorder %s19, 0
      %p109 = por %p107, %p108
      %s110 = ssub.s32 %s13, %s20
      %p111 = scmp.eq.s32.totalorder %s110, 0
      %s113 = sadd.s32 %s112, 1
      %s114 = scalar_select %p111, %s112, %s113
      %p117 = pneg %p111
      %p118 = scmp.eq.s32.totalorder %s13, 1
      %p119 = por %p117, %p118
      %p120 = scmp.ne.s32.totalorder %s112, %s115
      %p121 = scmp.eq.s32.totalorder %s13, 0
      %p122 = por %p120, %p121
      %p123 = scmp.ne.s32.totalorder %s112, %s115
      %p124 = scmp.eq.s32.totalorder %s18, 1
      %p125 = por %p123, %p124
      %p126 = scmp.ne.s32.totalorder %s115, %s116
      %p127 = scmp.eq.s32.totalorder %s18, 0
      %p128 = por %p126, %p127
      %p129 = scmp.ne.s32.totalorder %s115, %s116
      %p130 = scmp.eq.s32.totalorder %s19, 1
      %p131 = por %p129, %p130
      %p133 = scmp.ne.s32.totalorder %s116, %s132
      %p134 = scmp.eq.s32.totalorder %s19, 0
      %p135 = por %p133, %p134
      %p136 = scmp.le.s32.totalorder 1, %s13
      %p137 = scmp.lt.s32.totalorder %s13, 3
      %p138 = pnand %p136, %p137
      %p139 = pneg %p138
      // Predicated region
      $region9: #{tpu_custom_call.1} parent=5 // pred_check
        _
      $region10: #{tpu_custom_call.1} parent=5 // pred_check_branch
        %141 = sbr.rel (%p138) target = $region12
      $region11: #{tpu_custom_call.1} parent=5 // pred_region
        %s142 = ssub.s32 %s13, 1
        // Predicated region
        $region13: #{tpu_custom_call.1} parent=11 // pred_check
          %p143 = pneg %p60
        $region14: #{tpu_custom_call.1} parent=11 // pred_check_branch
          %145 = sbr.rel (%p143) target = $region16
        $region15: #{tpu_custom_call.1} parent=11 // pred_region
          _
        $region16: #{tpu_custom_call.1} parent=11 // pred_fallthru
          _
        // Predicated region
        $region17: #{tpu_custom_call.1} parent=11 // pred_check
          %p146 = pneg %p81
        $region18: #{tpu_custom_call.1} parent=11 // pred_check_branch
          %148 = sbr.rel (%p146) target = $region20
        $region19: #{tpu_custom_call.1} parent=11 // pred_region
          _
        $region20: #{tpu_custom_call.1} parent=11 // pred_fallthru
          _
        // Predicated region
        $region21: #{tpu_custom_call.1} parent=11 // pred_check
          %p149 = pneg %p102
        $region22: #{tpu_custom_call.1} parent=11 // pred_check_branch
          %151 = sbr.rel (%p149) target = $region24
        $region23: #{tpu_custom_call.1} parent=11 // pred_region
          _
        $region24: #{tpu_custom_call.1} parent=11 // pred_fallthru
          _
      $region12: #{tpu_custom_call.1} parent=5 // pred_fallthru
        _
      %p152 = scmp.lt.s32.totalorder %s13, 2
      // Predicated region
      $region25: #{tpu_custom_call.1} parent=5 // pred_check
        %p153 = pneg %p152
      $region26: #{tpu_custom_call.1} parent=5 // pred_check_branch
        %155 = sbr.rel (%p153) target = $region28
      $region27: #{tpu_custom_call.1} parent=5 // pred_region
        // Predicated region
        $region29: #{tpu_custom_call.1} parent=27 // pred_check
          %p156 = pneg %p33
        $region30: #{tpu_custom_call.1} parent=27 // pred_check_branch
          %158 = sbr.rel (%p156) target = $region32
        $region31: #{tpu_custom_call.1} parent=27 // pred_region
          %s159 = sand.u32 %s23, 1
          %s160 = scalar_lea.sflag [#allocation3], %s159
          %s161 = sand.u32 %s23, 1
          %s162 = smul.addr %s161, 1024
          %s163 = scalar_lea.vmem [#allocation2], %s162
          %s164 = smul.u32 128, %s13
          %s166 = ssub.s32 16384, 16384
          %167 = vsyncadd %s160, %s166
          %s168 = smul.addr %s164, 2
          %s169 = smul.addr %s168, 64
          %s170 = scalar_lea.hbm %s0, %s169
          %s171 = sshll.u32 %s163, 4
          %s172 = int_to_ptr.vmem [resolvable:$true] %s171
          %177 = dma.hbm_to_vmem [thread:$0]  %s170, 16384, %s172, %s160, 128, 128, 8
        $region32: #{tpu_custom_call.1} parent=27 // pred_fallthru
          _
      $region28: #{tpu_custom_call.1} parent=5 // pred_fallthru
        _
      %p178 = scmp.le.s32.totalorder 1, %s13
      %p179 = scmp.lt.s32.totalorder %s13, 3
      %p180 = pnand %p178, %p179
      %p181 = pneg %p180
      // Predicated region
      $region33: #{tpu_custom_call.1} parent=5 // pred_check
        _
      $region34: #{tpu_custom_call.1} parent=5 // pred_check_branch
        %183 = sbr.rel (%p180) target = $region36
      $region35: #{tpu_custom_call.1} parent=5 // pred_region
        %s184 = ssub.s32 %s13, 1
        %s185 = sand.u32 %s26, 1
        %s186 = scalar_lea.sflag [#allocation3], %s185
        %s187 = sand.u32 %s26, 1
        %s188 = smul.addr %s187, 1024
        %s189 = scalar_lea.vmem [#allocation2], %s188
        // Predicated region
        $region37: #{tpu_custom_call.1} parent=35 // pred_check
          %p190 = pneg %p39
        $region38: #{tpu_custom_call.1} parent=35 // pred_check_branch
          %192 = sbr.rel (%p190) target = $region40
        $region39: #{tpu_custom_call.1} parent=35 // pred_region
          %193 = dma.done %s186, 16384
        $region40: #{tpu_custom_call.1} parent=35 // pred_fallthru
          _
        %s194 = sand.u32 %s26, 1
        %s195 = scalar_lea.sflag [#allocation3], %s194
        %s196 = sand.u32 %s26, 1
        %s197 = smul.addr %s196, 1024
        %s198 = scalar_lea.vmem [#allocation2], %s197
        %p199 = pneg %p39
        %p200 = pneg %p36
        %p201 = pneg %p60
        %p202 = pneg %p57
        %p203 = pneg %p81
        %p204 = pneg %p78
        %p205 = pneg %p102
        %p206 = pneg %p99
        %p207 = pneg %p128
        %p208 = pneg %p125
        %s209 = smul.u32 128, %s18
        %p210 = scmp.lt.s32.totalorder %s209, 255
        %s211 = scalar_select %p210, %s209, 255
        %s212 = smul.addr %s211, 4
        %s213 = scalar_lea.vmem %s4, %s212
        %s214 = smul.u32 128, %s18
        %s215 = smul.u32 128, %s18
        %p216 = scmp.lt.s32.totalorder %s215, 255
        %s217 = scalar_select %p216, %s215, 255
        %s218 = smul.addr %s217, 4
        %s219 = scalar_lea.vmem %s4, %s218
        %s220 = smul.u32 128, %s18
        %v222 = vld [vmem:[%s189] sm:$0xff]
        %v223 = vld [vmem:[%s189 + $0x8] sm:$0xff]
        %v224 = vld [vmem:[%s189 + $0x10] sm:$0xff]
        %v225 = vld [vmem:[%s189 + $0x18] sm:$0xff]
        %v226 = vld [vmem:[%s189 + $0x20] sm:$0xff]
        %v227 = vld [vmem:[%s189 + $0x28] sm:$0xff]
        %v228 = vld [vmem:[%s189 + $0x30] sm:$0xff]
        %v229 = vld [vmem:[%s189 + $0x38] sm:$0xff]
        %v230 = vld [vmem:[%s189 + $0x40] sm:$0xff]
        %v231 = vld [vmem:[%s189 + $0x48] sm:$0xff]
        %v232 = vld [vmem:[%s189 + $0x50] sm:$0xff]
        %v233 = vld [vmem:[%s189 + $0x58] sm:$0xff]
        %v234 = vld [vmem:[%s189 + $0x60] sm:$0xff]
        %v235 = vld [vmem:[%s189 + $0x68] sm:$0xff]
        %v236 = vld [vmem:[%s189 + $0x70] sm:$0xff]
        %v237 = vld [vmem:[%s189 + $0x78] sm:$0xff]
        %v238 = vld [vmem:[%s189 + $0x80] sm:$0xff]
        %v239 = vld [vmem:[%s189 + $0x88] sm:$0xff]
        %v240 = vld [vmem:[%s189 + $0x90] sm:$0xff]
        %v241 = vld [vmem:[%s189 + $0x98] sm:$0xff]
        %v242 = vld [vmem:[%s189 + $0xa0] sm:$0xff]
        %v243 = vld [vmem:[%s189 + $0xa8] sm:$0xff]
        %v244 = vld [vmem:[%s189 + $0xb0] sm:$0xff]
        %v245 = vld [vmem:[%s189 + $0xb8] sm:$0xff]
        %v246 = vld [vmem:[%s189 + $0xc0] sm:$0xff]
        %v247 = vld [vmem:[%s189 + $0xc8] sm:$0xff]
        %v248 = vld [vmem:[%s189 + $0xd0] sm:$0xff]
        %v249 = vld [vmem:[%s189 + $0xd8] sm:$0xff]
        %v250 = vld [vmem:[%s189 + $0xe0] sm:$0xff]
        %v251 = vld [vmem:[%s189 + $0xe8] sm:$0xff]
        %v252 = vld [vmem:[%s189 + $0xf0] sm:$0xff]
        %v253 = vld [vmem:[%s189 + $0xf8] sm:$0xff]
        %v254 = vld [vmem:[%s189 + $0x100] sm:$0xff]
        %v255 = vld [vmem:[%s189 + $0x108] sm:$0xff]
        %v256 = vld [vmem:[%s189 + $0x110] sm:$0xff]
        %v257 = vld [vmem:[%s189 + $0x118] sm:$0xff]
        %v258 = vld [vmem:[%s189 + $0x120] sm:$0xff]
        %v259 = vld [vmem:[%s189 + $0x128] sm:$0xff]
        %v260 = vld [vmem:[%s189 + $0x130] sm:$0xff]
        %v261 = vld [vmem:[%s189 + $0x138] sm:$0xff]
        %v262 = vld [vmem:[%s189 + $0x140] sm:$0xff]
        %v263 = vld [vmem:[%s189 + $0x148] sm:$0xff]
        %v264 = vld [vmem:[%s189 + $0x150] sm:$0xff]
        %v265 = vld [vmem:[%s189 + $0x158] sm:$0xff]
        %v266 = vld [vmem:[%s189 + $0x160] sm:$0xff]
        %v267 = vld [vmem:[%s189 + $0x168] sm:$0xff]
        %v268 = vld [vmem:[%s189 + $0x170] sm:$0xff]
        %v269 = vld [vmem:[%s189 + $0x178] sm:$0xff]
        %v270 = vld [vmem:[%s189 + $0x180] sm:$0xff]
        %v271 = vld [vmem:[%s189 + $0x188] sm:$0xff]
        %v272 = vld [vmem:[%s189 + $0x190] sm:$0xff]
        %v273 = vld [vmem:[%s189 + $0x198] sm:$0xff]
        %v274 = vld [vmem:[%s189 + $0x1a0] sm:$0xff]
        %v275 = vld [vmem:[%s189 + $0x1a8] sm:$0xff]
        %v276 = vld [vmem:[%s189 + $0x1b0] sm:$0xff]
        %v277 = vld [vmem:[%s189 + $0x1b8] sm:$0xff]
        %v278 = vld [vmem:[%s189 + $0x1c0] sm:$0xff]
        %v279 = vld [vmem:[%s189 + $0x1c8] sm:$0xff]
        %v280 = vld [vmem:[%s189 + $0x1d0] sm:$0xff]
        %v281 = vld [vmem:[%s189 + $0x1d8] sm:$0xff]
        %v282 = vld [vmem:[%s189 + $0x1e0] sm:$0xff]
        %v283 = vld [vmem:[%s189 + $0x1e8] sm:$0xff]
        %v284 = vld [vmem:[%s189 + $0x1f0] sm:$0xff]
        %v285 = vld [vmem:[%s189 + $0x1f8] sm:$0xff]
        %v286 = vld [vmem:[%s189 + $0x200] sm:$0xff]
        %v287 = vld [vmem:[%s189 + $0x208] sm:$0xff]
        %v288 = vld [vmem:[%s189 + $0x210] sm:$0xff]
        %v289 = vld [vmem:[%s189 + $0x218] sm:$0xff]
        %v290 = vld [vmem:[%s189 + $0x220] sm:$0xff]
        %v291 = vld [vmem:[%s189 + $0x228] sm:$0xff]
        %v292 = vld [vmem:[%s189 + $0x230] sm:$0xff]
        %v293 = vld [vmem:[%s189 + $0x238] sm:$0xff]
        %v294 = vld [vmem:[%s189 + $0x240] sm:$0xff]
        %v295 = vld [vmem:[%s189 + $0x248] sm:$0xff]
        %v296 = vld [vmem:[%s189 + $0x250] sm:$0xff]
        %v297 = vld [vmem:[%s189 + $0x258] sm:$0xff]
        %v298 = vld [vmem:[%s189 + $0x260] sm:$0xff]
        %v299 = vld [vmem:[%s189 + $0x268] sm:$0xff]
        %v300 = vld [vmem:[%s189 + $0x270] sm:$0xff]
        %v301 = vld [vmem:[%s189 + $0x278] sm:$0xff]
        %v302 = vld [vmem:[%s189 + $0x280] sm:$0xff]
        %v303 = vld [vmem:[%s189 + $0x288] sm:$0xff]
        %v304 = vld [vmem:[%s189 + $0x290] sm:$0xff]
        %v305 = vld [vmem:[%s189 + $0x298] sm:$0xff]
        %v306 = vld [vmem:[%s189 + $0x2a0] sm:$0xff]
        %v307 = vld [vmem:[%s189 + $0x2a8] sm:$0xff]
        %v308 = vld [vmem:[%s189 + $0x2b0] sm:$0xff]
        %v309 = vld [vmem:[%s189 + $0x2b8] sm:$0xff]
        %v310 = vld [vmem:[%s189 + $0x2c0] sm:$0xff]
        %v311 = vld [vmem:[%s189 + $0x2c8] sm:$0xff]
        %v312 = vld [vmem:[%s189 + $0x2d0] sm:$0xff]
        %v313 = vld [vmem:[%s189 + $0x2d8] sm:$0xff]
        %v314 = vld [vmem:[%s189 + $0x2e0] sm:$0xff]
        %v315 = vld [vmem:[%s189 + $0x2e8] sm:$0xff]
        %v316 = vld [vmem:[%s189 + $0x2f0] sm:$0xff]
        %v317 = vld [vmem:[%s189 + $0x2f8] sm:$0xff]
        %v318 = vld [vmem:[%s189 + $0x300] sm:$0xff]
        %v319 = vld [vmem:[%s189 + $0x308] sm:$0xff]
        %v320 = vld [vmem:[%s189 + $0x310] sm:$0xff]
        %v321 = vld [vmem:[%s189 + $0x318] sm:$0xff]
        %v322 = vld [vmem:[%s189 + $0x320] sm:$0xff]
        %v323 = vld [vmem:[%s189 + $0x328] sm:$0xff]
        %v324 = vld [vmem:[%s189 + $0x330] sm:$0xff]
        %v325 = vld [vmem:[%s189 + $0x338] sm:$0xff]
        %v326 = vld [vmem:[%s189 + $0x340] sm:$0xff]
        %v327 = vld [vmem:[%s189 + $0x348] sm:$0xff]
        %v328 = vld [vmem:[%s189 + $0x350] sm:$0xff]
        %v329 = vld [vmem:[%s189 + $0x358] sm:$0xff]
        %v330 = vld [vmem:[%s189 + $0x360] sm:$0xff]
        %v331 = vld [vmem:[%s189 + $0x368] sm:$0xff]
        %v332 = vld [vmem:[%s189 + $0x370] sm:$0xff]
        %v333 = vld [vmem:[%s189 + $0x378] sm:$0xff]
        %v334 = vld [vmem:[%s189 + $0x380] sm:$0xff]
        %v335 = vld [vmem:[%s189 + $0x388] sm:$0xff]
        %v336 = vld [vmem:[%s189 + $0x390] sm:$0xff]
        %v337 = vld [vmem:[%s189 + $0x398] sm:$0xff]
        %v338 = vld [vmem:[%s189 + $0x3a0] sm:$0xff]
        %v339 = vld [vmem:[%s189 + $0x3a8] sm:$0xff]
        %v340 = vld [vmem:[%s189 + $0x3b0] sm:$0xff]
        %v341 = vld [vmem:[%s189 + $0x3b8] sm:$0xff]
        %v342 = vld [vmem:[%s189 + $0x3c0] sm:$0xff]
        %v343 = vld [vmem:[%s189 + $0x3c8] sm:$0xff]
        %v344 = vld [vmem:[%s189 + $0x3d0] sm:$0xff]
        %v345 = vld [vmem:[%s189 + $0x3d8] sm:$0xff]
        %v346 = vld [vmem:[%s189 + $0x3e0] sm:$0xff]
        %v347 = vld [vmem:[%s189 + $0x3e8] sm:$0xff]
        %v348 = vld [vmem:[%s189 + $0x3f0] sm:$0xff]
        %v349 = vld [vmem:[%s189 + $0x3f8] sm:$0xff]
        %v350 = vld [vmem:[%s1] sm:$0xf]
        %v351 = vld [vmem:[%s1 + $0x4] sm:$0xf]
        %v352 = vld [vmem:[%s1 + $0x8] sm:$0xf]
        %v353 = vld [vmem:[%s1 + $0xc] sm:$0xf]
        %v354 = vld [vmem:[%s1 + $0x10] sm:$0xf]
        %v355 = vld [vmem:[%s1 + $0x14] sm:$0xf]
        %v356 = vld [vmem:[%s1 + $0x18] sm:$0xf]
        %v357 = vld [vmem:[%s1 + $0x1c] sm:$0xf]
        %v358 = vld [vmem:[%s1 + $0x20] sm:$0xf]
        %v359 = vld [vmem:[%s1 + $0x24] sm:$0xf]
        %v360 = vld [vmem:[%s1 + $0x28] sm:$0xf]
        %v361 = vld [vmem:[%s1 + $0x2c] sm:$0xf]
        %v362 = vld [vmem:[%s1 + $0x30] sm:$0xf]
        %v363 = vld [vmem:[%s1 + $0x34] sm:$0xf]
        %v364 = vld [vmem:[%s1 + $0x38] sm:$0xf]
        %v365 = vld [vmem:[%s1 + $0x3c] sm:$0xf]
        %v366 = vld [vmem:[%s1 + $0x40] sm:$0xf]
        %v367 = vld [vmem:[%s1 + $0x44] sm:$0xf]
        %v368 = vld [vmem:[%s1 + $0x48] sm:$0xf]
        %v369 = vld [vmem:[%s1 + $0x4c] sm:$0xf]
        %v370 = vld [vmem:[%s1 + $0x50] sm:$0xf]
        %v371 = vld [vmem:[%s1 + $0x54] sm:$0xf]
        %v372 = vld [vmem:[%s1 + $0x58] sm:$0xf]
        %v373 = vld [vmem:[%s1 + $0x5c] sm:$0xf]
        %v374 = vld [vmem:[%s1 + $0x60] sm:$0xf]
        %v375 = vld [vmem:[%s1 + $0x64] sm:$0xf]
        %v376 = vld [vmem:[%s1 + $0x68] sm:$0xf]
        %v377 = vld [vmem:[%s1 + $0x6c] sm:$0xf]
        %v378 = vld [vmem:[%s1 + $0x70] sm:$0xf]
        %v379 = vld [vmem:[%s1 + $0x74] sm:$0xf]
        %v380 = vld [vmem:[%s1 + $0x78] sm:$0xf]
        %v381 = vld [vmem:[%s1 + $0x7c] sm:$0xf]
        %v510 = vunpack.c.l.b16 %v222
        %v511 = vunpack.c.h.b16 %v222
        %v512 = vunpack.c.l.b16 %v223
        %v513 = vunpack.c.h.b16 %v223
        %v514 = vunpack.c.l.b16 %v224
        %v515 = vunpack.c.h.b16 %v224
        %v516 = vunpack.c.l.b16 %v225
        %v517 = vunpack.c.h.b16 %v225
        %v518 = vunpack.c.l.b16 %v226
        %v519 = vunpack.c.h.b16 %v226
        %v520 = vunpack.c.l.b16 %v227
        %v521 = vunpack.c.h.b16 %v227
        %v522 = vunpack.c.l.b16 %v228
        %v523 = vunpack.c.h.b16 %v228
        %v524 = vunpack.c.l.b16 %v229
        %v525 = vunpack.c.h.b16 %v229
        %v526 = vunpack.c.l.b16 %v230
        %v527 = vunpack.c.h.b16 %v230
        %v528 = vunpack.c.l.b16 %v231
        %v529 = vunpack.c.h.b16 %v231
        %v530 = vunpack.c.l.b16 %v232
        %v531 = vunpack.c.h.b16 %v232
        %v532 = vunpack.c.l.b16 %v233
        %v533 = vunpack.c.h.b16 %v233
        %v534 = vunpack.c.l.b16 %v234
        %v535 = vunpack.c.h.b16 %v234
        %v536 = vunpack.c.l.b16 %v235
        %v537 = vunpack.c.h.b16 %v235
        %v538 = vunpack.c.l.b16 %v236
        %v539 = vunpack.c.h.b16 %v236
        %v540 = vunpack.c.l.b16 %v237
        %v541 = vunpack.c.h.b16 %v237
        %v542 = vunpack.c.l.b16 %v238
        %v543 = vunpack.c.h.b16 %v238
        %v544 = vunpack.c.l.b16 %v239
        %v545 = vunpack.c.h.b16 %v239
        %v546 = vunpack.c.l.b16 %v240
        %v547 = vunpack.c.h.b16 %v240
        %v548 = vunpack.c.l.b16 %v241
        %v549 = vunpack.c.h.b16 %v241
        %v550 = vunpack.c.l.b16 %v242
        %v551 = vunpack.c.h.b16 %v242
        %v552 = vunpack.c.l.b16 %v243
        %v553 = vunpack.c.h.b16 %v243
        %v554 = vunpack.c.l.b16 %v244
        %v555 = vunpack.c.h.b16 %v244
        %v556 = vunpack.c.l.b16 %v245
        %v557 = vunpack.c.h.b16 %v245
        %v558 = vunpack.c.l.b16 %v246
        %v559 = vunpack.c.h.b16 %v246
        %v560 = vunpack.c.l.b16 %v247
        %v561 = vunpack.c.h.b16 %v247
        %v562 = vunpack.c.l.b16 %v248
        %v563 = vunpack.c.h.b16 %v248
        %v564 = vunpack.c.l.b16 %v249
        %v565 = vunpack.c.h.b16 %v249
        %v566 = vunpack.c.l.b16 %v250
        %v567 = vunpack.c.h.b16 %v250
        %v568 = vunpack.c.l.b16 %v251
        %v569 = vunpack.c.h.b16 %v251
        %v570 = vunpack.c.l.b16 %v252
        %v571 = vunpack.c.h.b16 %v252
        %v572 = vunpack.c.l.b16 %v253
        %v573 = vunpack.c.h.b16 %v253
        %v574 = vunpack.c.l.b16 %v254
        %v575 = vunpack.c.h.b16 %v254
        %v576 = vunpack.c.l.b16 %v255
        %v577 = vunpack.c.h.b16 %v255
        %v578 = vunpack.c.l.b16 %v256
        %v579 = vunpack.c.h.b16 %v256
        %v580 = vunpack.c.l.b16 %v257
        %v581 = vunpack.c.h.b16 %v257
        %v582 = vunpack.c.l.b16 %v258
        %v583 = vunpack.c.h.b16 %v258
        %v584 = vunpack.c.l.b16 %v259
        %v585 = vunpack.c.h.b16 %v259
        %v586 = vunpack.c.l.b16 %v260
        %v587 = vunpack.c.h.b16 %v260
        %v588 = vunpack.c.l.b16 %v261
        %v589 = vunpack.c.h.b16 %v261
        %v590 = vunpack.c.l.b16 %v262
        %v591 = vunpack.c.h.b16 %v262
        %v592 = vunpack.c.l.b16 %v263
        %v593 = vunpack.c.h.b16 %v263
        %v594 = vunpack.c.l.b16 %v264
        %v595 = vunpack.c.h.b16 %v264
        %v596 = vunpack.c.l.b16 %v265
        %v597 = vunpack.c.h.b16 %v265
        %v598 = vunpack.c.l.b16 %v266
        %v599 = vunpack.c.h.b16 %v266
        %v600 = vunpack.c.l.b16 %v267
        %v601 = vunpack.c.h.b16 %v267
        %v602 = vunpack.c.l.b16 %v268
        %v603 = vunpack.c.h.b16 %v268
        %v604 = vunpack.c.l.b16 %v269
        %v605 = vunpack.c.h.b16 %v269
        %v606 = vunpack.c.l.b16 %v270
        %v607 = vunpack.c.h.b16 %v270
        %v608 = vunpack.c.l.b16 %v271
        %v609 = vunpack.c.h.b16 %v271
        %v610 = vunpack.c.l.b16 %v272
        %v611 = vunpack.c.h.b16 %v272
        %v612 = vunpack.c.l.b16 %v273
        %v613 = vunpack.c.h.b16 %v273
        %v614 = vunpack.c.l.b16 %v274
        %v615 = vunpack.c.h.b16 %v274
        %v616 = vunpack.c.l.b16 %v275
        %v617 = vunpack.c.h.b16 %v275
        %v618 = vunpack.c.l.b16 %v276
        %v619 = vunpack.c.h.b16 %v276
        %v620 = vunpack.c.l.b16 %v277
        %v621 = vunpack.c.h.b16 %v277
        %v622 = vunpack.c.l.b16 %v278
        %v623 = vunpack.c.h.b16 %v278
        %v624 = vunpack.c.l.b16 %v279
        %v625 = vunpack.c.h.b16 %v279
        %v626 = vunpack.c.l.b16 %v280
        %v627 = vunpack.c.h.b16 %v280
        %v628 = vunpack.c.l.b16 %v281
        %v629 = vunpack.c.h.b16 %v281
        %v630 = vunpack.c.l.b16 %v282
        %v631 = vunpack.c.h.b16 %v282
        %v632 = vunpack.c.l.b16 %v283
        %v633 = vunpack.c.h.b16 %v283
        %v634 = vunpack.c.l.b16 %v284
        %v635 = vunpack.c.h.b16 %v284
        %v636 = vunpack.c.l.b16 %v285
        %v637 = vunpack.c.h.b16 %v285
        %v638 = vunpack.c.l.b16 %v286
        %v639 = vunpack.c.h.b16 %v286
        %v640 = vunpack.c.l.b16 %v287
        %v641 = vunpack.c.h.b16 %v287
        %v642 = vunpack.c.l.b16 %v288
        %v643 = vunpack.c.h.b16 %v288
        %v644 = vunpack.c.l.b16 %v289
        %v645 = vunpack.c.h.b16 %v289
        %v646 = vunpack.c.l.b16 %v290
        %v647 = vunpack.c.h.b16 %v290
        %v648 = vunpack.c.l.b16 %v291
        %v649 = vunpack.c.h.b16 %v291
        %v650 = vunpack.c.l.b16 %v292
        %v651 = vunpack.c.h.b16 %v292
        %v652 = vunpack.c.l.b16 %v293
        %v653 = vunpack.c.h.b16 %v293
        %v654 = vunpack.c.l.b16 %v294
        %v655 = vunpack.c.h.b16 %v294
        %v656 = vunpack.c.l.b16 %v295
        %v657 = vunpack.c.h.b16 %v295
        %v658 = vunpack.c.l.b16 %v296
        %v659 = vunpack.c.h.b16 %v296
        %v660 = vunpack.c.l.b16 %v297
        %v661 = vunpack.c.h.b16 %v297
        %v662 = vunpack.c.l.b16 %v298
        %v663 = vunpack.c.h.b16 %v298
        %v664 = vunpack.c.l.b16 %v299
        %v665 = vunpack.c.h.b16 %v299
        %v666 = vunpack.c.l.b16 %v300
        %v667 = vunpack.c.h.b16 %v300
        %v668 = vunpack.c.l.b16 %v301
        %v669 = vunpack.c.h.b16 %v301
        %v670 = vunpack.c.l.b16 %v302
        %v671 = vunpack.c.h.b16 %v302
        %v672 = vunpack.c.l.b16 %v303
        %v673 = vunpack.c.h.b16 %v303
        %v674 = vunpack.c.l.b16 %v304
        %v675 = vunpack.c.h.b16 %v304
        %v676 = vunpack.c.l.b16 %v305
        %v677 = vunpack.c.h.b16 %v305
        %v678 = vunpack.c.l.b16 %v306
        %v679 = vunpack.c.h.b16 %v306
        %v680 = vunpack.c.l.b16 %v307
        %v681 = vunpack.c.h.b16 %v307
        %v682 = vunpack.c.l.b16 %v308
        %v683 = vunpack.c.h.b16 %v308
        %v684 = vunpack.c.l.b16 %v309
        %v685 = vunpack.c.h.b16 %v309
        %v686 = vunpack.c.l.b16 %v310
        %v687 = vunpack.c.h.b16 %v310
        %v688 = vunpack.c.l.b16 %v311
        %v689 = vunpack.c.h.b16 %v311
        %v690 = vunpack.c.l.b16 %v312
        %v691 = vunpack.c.h.b16 %v312
        %v692 = vunpack.c.l.b16 %v313
        %v693 = vunpack.c.h.b16 %v313
        %v694 = vunpack.c.l.b16 %v314
        %v695 = vunpack.c.h.b16 %v314
        %v696 = vunpack.c.l.b16 %v315
        %v697 = vunpack.c.h.b16 %v315
        %v698 = vunpack.c.l.b16 %v316
        %v699 = vunpack.c.h.b16 %v316
        %v700 = vunpack.c.l.b16 %v317
        %v701 = vunpack.c.h.b16 %v317
        %v702 = vunpack.c.l.b16 %v318
        %v703 = vunpack.c.h.b16 %v318
        %v704 = vunpack.c.l.b16 %v319
        %v705 = vunpack.c.h.b16 %v319
        %v706 = vunpack.c.l.b16 %v320
        %v707 = vunpack.c.h.b16 %v320
        %v708 = vunpack.c.l.b16 %v321
        %v709 = vunpack.c.h.b16 %v321
        %v710 = vunpack.c.l.b16 %v322
        %v711 = vunpack.c.h.b16 %v322
        %v712 = vunpack.c.l.b16 %v323
        %v713 = vunpack.c.h.b16 %v323
        %v714 = vunpack.c.l.b16 %v324
        %v715 = vunpack.c.h.b16 %v324
        %v716 = vunpack.c.l.b16 %v325
        %v717 = vunpack.c.h.b16 %v325
        %v718 = vunpack.c.l.b16 %v326
        %v719 = vunpack.c.h.b16 %v326
        %v720 = vunpack.c.l.b16 %v327
        %v721 = vunpack.c.h.b16 %v327
        %v722 = vunpack.c.l.b16 %v328
        %v723 = vunpack.c.h.b16 %v328
        %v724 = vunpack.c.l.b16 %v329
        %v725 = vunpack.c.h.b16 %v329
        %v726 = vunpack.c.l.b16 %v330
        %v727 = vunpack.c.h.b16 %v330
        %v728 = vunpack.c.l.b16 %v331
        %v729 = vunpack.c.h.b16 %v331
        %v730 = vunpack.c.l.b16 %v332
        %v731 = vunpack.c.h.b16 %v332
        %v732 = vunpack.c.l.b16 %v333
        %v733 = vunpack.c.h.b16 %v333
        %v734 = vunpack.c.l.b16 %v334
        %v735 = vunpack.c.h.b16 %v334
        %v736 = vunpack.c.l.b16 %v335
        %v737 = vunpack.c.h.b16 %v335
        %v738 = vunpack.c.l.b16 %v336
        %v739 = vunpack.c.h.b16 %v336
        %v740 = vunpack.c.l.b16 %v337
        %v741 = vunpack.c.h.b16 %v337
        %v742 = vunpack.c.l.b16 %v338
        %v743 = vunpack.c.h.b16 %v338
        %v744 = vunpack.c.l.b16 %v339
        %v745 = vunpack.c.h.b16 %v339
        %v746 = vunpack.c.l.b16 %v340
        %v747 = vunpack.c.h.b16 %v340
        %v748 = vunpack.c.l.b16 %v341
        %v749 = vunpack.c.h.b16 %v341
        %v750 = vunpack.c.l.b16 %v342
        %v751 = vunpack.c.h.b16 %v342
        %v752 = vunpack.c.l.b16 %v343
        %v753 = vunpack.c.h.b16 %v343
        %v754 = vunpack.c.l.b16 %v344
        %v755 = vunpack.c.h.b16 %v344
        %v756 = vunpack.c.l.b16 %v345
        %v757 = vunpack.c.h.b16 %v345
        %v758 = vunpack.c.l.b16 %v346
        %v759 = vunpack.c.h.b16 %v346
        %v760 = vunpack.c.l.b16 %v347
        %v761 = vunpack.c.h.b16 %v347
        %v762 = vunpack.c.l.b16 %v348
        %v763 = vunpack.c.h.b16 %v348
        %v764 = vunpack.c.l.b16 %v349
        %v765 = vunpack.c.h.b16 %v349
        %v766 = vpack.c.b16 %v512, %v510
        %v767 = vpack.c.b16 %v513, %v511
        %v768 = vpack.c.b16 %v516, %v514
        %v769 = vpack.c.b16 %v517, %v515
        %v770 = vpack.c.b16 %v520, %v518
        %v771 = vpack.c.b16 %v521, %v519
        %v772 = vpack.c.b16 %v524, %v522
        %v773 = vpack.c.b16 %v525, %v523
        %v774 = vpack.c.b16 %v528, %v526
        %v775 = vpack.c.b16 %v529, %v527
        %v776 = vpack.c.b16 %v532, %v530
        %v777 = vpack.c.b16 %v533, %v531
        %v778 = vpack.c.b16 %v536, %v534
        %v779 = vpack.c.b16 %v537, %v535
        %v780 = vpack.c.b16 %v540, %v538
        %v781 = vpack.c.b16 %v541, %v539
        %v782 = vpack.c.b16 %v544, %v542
        %v783 = vpack.c.b16 %v545, %v543
        %v784 = vpack.c.b16 %v548, %v546
        %v785 = vpack.c.b16 %v549, %v547
        %v786 = vpack.c.b16 %v552, %v550
        %v787 = vpack.c.b16 %v553, %v551
        %v788 = vpack.c.b16 %v556, %v554
        %v789 = vpack.c.b16 %v557, %v555
        %v790 = vpack.c.b16 %v560, %v558
        %v791 = vpack.c.b16 %v561, %v559
        %v792 = vpack.c.b16 %v564, %v562
        %v793 = vpack.c.b16 %v565, %v563
        %v794 = vpack.c.b16 %v568, %v566
        %v795 = vpack.c.b16 %v569, %v567
        %v796 = vpack.c.b16 %v572, %v570
        %v797 = vpack.c.b16 %v573, %v571
        %v798 = vpack.c.b16 %v576, %v574
        %v799 = vpack.c.b16 %v577, %v575
        %v800 = vpack.c.b16 %v580, %v578
        %v801 = vpack.c.b16 %v581, %v579
        %v802 = vpack.c.b16 %v584, %v582
        %v803 = vpack.c.b16 %v585, %v583
        %v804 = vpack.c.b16 %v588, %v586
        %v805 = vpack.c.b16 %v589, %v587
        %v806 = vpack.c.b16 %v592, %v590
        %v807 = vpack.c.b16 %v593, %v591
        %v808 = vpack.c.b16 %v596, %v594
        %v809 = vpack.c.b16 %v597, %v595
        %v810 = vpack.c.b16 %v600, %v598
        %v811 = vpack.c.b16 %v601, %v599
        %v812 = vpack.c.b16 %v604, %v602
        %v813 = vpack.c.b16 %v605, %v603
        %v814 = vpack.c.b16 %v608, %v606
        %v815 = vpack.c.b16 %v609, %v607
        %v816 = vpack.c.b16 %v612, %v610
        %v817 = vpack.c.b16 %v613, %v611
        %v818 = vpack.c.b16 %v616, %v614
        %v819 = vpack.c.b16 %v617, %v615
        %v820 = vpack.c.b16 %v620, %v618
        %v821 = vpack.c.b16 %v621, %v619
        %v822 = vpack.c.b16 %v624, %v622
        %v823 = vpack.c.b16 %v625, %v623
        %v824 = vpack.c.b16 %v628, %v626
        %v825 = vpack.c.b16 %v629, %v627
        %v826 = vpack.c.b16 %v632, %v630
        %v827 = vpack.c.b16 %v633, %v631
        %v828 = vpack.c.b16 %v636, %v634
        %v829 = vpack.c.b16 %v637, %v635
        %v830 = vpack.c.b16 %v640, %v638
        %v831 = vpack.c.b16 %v641, %v639
        %v832 = vpack.c.b16 %v644, %v642
        %v833 = vpack.c.b16 %v645, %v643
        %v834 = vpack.c.b16 %v648, %v646
        %v835 = vpack.c.b16 %v649, %v647
        %v836 = vpack.c.b16 %v652, %v650
        %v837 = vpack.c.b16 %v653, %v651
        %v838 = vpack.c.b16 %v656, %v654
        %v839 = vpack.c.b16 %v657, %v655
        %v840 = vpack.c.b16 %v660, %v658
        %v841 = vpack.c.b16 %v661, %v659
        %v842 = vpack.c.b16 %v664, %v662
        %v843 = vpack.c.b16 %v665, %v663
        %v844 = vpack.c.b16 %v668, %v666
        %v845 = vpack.c.b16 %v669, %v667
        %v846 = vpack.c.b16 %v672, %v670
        %v847 = vpack.c.b16 %v673, %v671
        %v848 = vpack.c.b16 %v676, %v674
        %v849 = vpack.c.b16 %v677, %v675
        %v850 = vpack.c.b16 %v680, %v678
        %v851 = vpack.c.b16 %v681, %v679
        %v852 = vpack.c.b16 %v684, %v682
        %v853 = vpack.c.b16 %v685, %v683
        %v854 = vpack.c.b16 %v688, %v686
        %v855 = vpack.c.b16 %v689, %v687
        %v856 = vpack.c.b16 %v692, %v690
        %v857 = vpack.c.b16 %v693, %v691
        %v858 = vpack.c.b16 %v696, %v694
        %v859 = vpack.c.b16 %v697, %v695
        %v860 = vpack.c.b16 %v700, %v698
        %v861 = vpack.c.b16 %v701, %v699
        %v862 = vpack.c.b16 %v704, %v702
        %v863 = vpack.c.b16 %v705, %v703
        %v864 = vpack.c.b16 %v708, %v706
        %v865 = vpack.c.b16 %v709, %v707
        %v866 = vpack.c.b16 %v712, %v710
        %v867 = vpack.c.b16 %v713, %v711
        %v868 = vpack.c.b16 %v716, %v714
        %v869 = vpack.c.b16 %v717, %v715
        %v870 = vpack.c.b16 %v720, %v718
        %v871 = vpack.c.b16 %v721, %v719
        %v872 = vpack.c.b16 %v724, %v722
        %v873 = vpack.c.b16 %v725, %v723
        %v874 = vpack.c.b16 %v728, %v726
        %v875 = vpack.c.b16 %v729, %v727
        %v876 = vpack.c.b16 %v732, %v730
        %v877 = vpack.c.b16 %v733, %v731
        %v878 = vpack.c.b16 %v736, %v734
        %v879 = vpack.c.b16 %v737, %v735
        %v880 = vpack.c.b16 %v740, %v738
        %v881 = vpack.c.b16 %v741, %v739
        %v882 = vpack.c.b16 %v744, %v742
        %v883 = vpack.c.b16 %v745, %v743
        %v884 = vpack.c.b16 %v748, %v746
        %v885 = vpack.c.b16 %v749, %v747
        %v886 = vpack.c.b16 %v752, %v750
        %v887 = vpack.c.b16 %v753, %v751
        %v888 = vpack.c.b16 %v756, %v754
        %v889 = vpack.c.b16 %v757, %v755
        %v890 = vpack.c.b16 %v760, %v758
        %v891 = vpack.c.b16 %v761, %v759
        %v892 = vpack.c.b16 %v764, %v762
        %v893 = vpack.c.b16 %v765, %v763
        %v1054 = vunpack.c.l.b16 %v350
        %v1055 = vunpack.c.l.b16 %v351
        %v1056 = vunpack.c.l.b16 %v352
        %v1057 = vunpack.c.l.b16 %v353
        %v1058 = vunpack.c.l.b16 %v354
        %v1059 = vunpack.c.l.b16 %v355
        %v1060 = vunpack.c.l.b16 %v356
        %v1061 = vunpack.c.l.b16 %v357
        %v1062 = vunpack.c.l.b16 %v358
        %v1063 = vunpack.c.l.b16 %v359
        %v1064 = vunpack.c.l.b16 %v360
        %v1065 = vunpack.c.l.b16 %v361
        %v1066 = vunpack.c.l.b16 %v362
        %v1067 = vunpack.c.l.b16 %v363
        %v1068 = vunpack.c.l.b16 %v364
        %v1069 = vunpack.c.l.b16 %v365
        %v1070 = vunpack.c.l.b16 %v366
        %v1071 = vunpack.c.l.b16 %v367
        %v1072 = vunpack.c.l.b16 %v368
        %v1073 = vunpack.c.l.b16 %v369
        %v1074 = vunpack.c.l.b16 %v370
        %v1075 = vunpack.c.l.b16 %v371
        %v1076 = vunpack.c.l.b16 %v372
        %v1077 = vunpack.c.l.b16 %v373
        %v1078 = vunpack.c.l.b16 %v374
        %v1079 = vunpack.c.l.b16 %v375
        %v1080 = vunpack.c.l.b16 %v376
        %v1081 = vunpack.c.l.b16 %v377
        %v1082 = vunpack.c.l.b16 %v378
        %v1083 = vunpack.c.l.b16 %v379
        %v1084 = vunpack.c.l.b16 %v380
        %v1085 = vunpack.c.l.b16 %v381
        %v1086 = vpack.c.b16 %v1055, %v1054
        %v1087 = vpack.c.b16 %v1057, %v1056
        %v1088 = vpack.c.b16 %v1059, %v1058
        %v1089 = vpack.c.b16 %v1061, %v1060
        %v1090 = vpack.c.b16 %v1063, %v1062
        %v1091 = vpack.c.b16 %v1065, %v1064
        %v1092 = vpack.c.b16 %v1067, %v1066
        %v1093 = vpack.c.b16 %v1069, %v1068
        %v1094 = vpack.c.b16 %v1071, %v1070
        %v1095 = vpack.c.b16 %v1073, %v1072
        %v1096 = vpack.c.b16 %v1075, %v1074
        %v1097 = vpack.c.b16 %v1077, %v1076
        %v1098 = vpack.c.b16 %v1079, %v1078
        %v1099 = vpack.c.b16 %v1081, %v1080
        %v1100 = vpack.c.b16 %v1083, %v1082
        %v1101 = vpack.c.b16 %v1085, %v1084
        %1118 = vmatprep.subr.bf16.mxu0 0
        %1119 = vmatpush1.bf16.msra.mxu0 %v1086
        %1120 = vmatprep.subr.bf16.mxu0 0
        %1121 = vmatpush1.bf16.msra.mxu0 %v1087
        %1122 = vmatprep.subr.bf16.mxu0 0
        %1123 = vmatpush1.bf16.msra.mxu0 %v1088
        %1124 = vmatprep.subr.bf16.mxu0 0
        %1125 = vmatpush1.bf16.msra.mxu0 %v1089
        %1126 = vmatprep.subr.bf16.mxu0 0
        %1127 = vmatpush1.bf16.msra.mxu0 %v1090
        %1128 = vmatprep.subr.bf16.mxu0 0
        %1129 = vmatpush1.bf16.msra.mxu0 %v1091
        %1130 = vmatprep.subr.bf16.mxu0 0
        %1131 = vmatpush1.bf16.msra.mxu0 %v1092
        %1132 = vmatprep.subr.bf16.mxu0 0
        %1133 = vmatpush1.bf16.msra.mxu0 %v1093
        %1134 = vmatprep.subr.bf16.mxu0 0
        %1135 = vmatpush1.bf16.msra.mxu0 %v1094
        %1136 = vmatprep.subr.bf16.mxu0 0
        %1137 = vmatpush1.bf16.msra.mxu0 %v1095
        %1138 = vmatprep.subr.bf16.mxu0 0
        %1139 = vmatpush1.bf16.msra.mxu0 %v1096
        %1140 = vmatprep.subr.bf16.mxu0 0
        %1141 = vmatpush1.bf16.msra.mxu0 %v1097
        %1142 = vmatprep.subr.bf16.mxu0 0
        %1143 = vmatpush1.bf16.msra.mxu0 %v1098
        %1144 = vmatprep.subr.bf16.mxu0 0
        %1145 = vmatpush1.bf16.msra.mxu0 %v1099
        %1146 = vmatprep.subr.bf16.mxu0 0
        %1147 = vmatpush1.bf16.msra.mxu0 %v1100
        %1148 = vmatprep.subr.bf16.mxu0 0
        %1149 = vmatpush1.bf16.msra.mxu0 %v1101
        %1150 = vmatprep.mubr.bf16.mxu0 %v767
        %1151 = vmatmul.mubr.bf16.gmra.mrb[0].mxu0 %v766
        %v1152 = vpop.f32.mrb[0].mxu0
        %v1153 = vadd.f32 0.0, %v1152
        %v1154 = vpop.f32.mrb[0].mxu0
        %v1155 = vpop.f32.mrb[0].mxu0
        %v1156 = vadd.f32 0.0, %v1155
        %v1157 = vpop.f32.mrb[0].mxu0
        %1158 = vmatprep.mubr.bf16.mxu0 %v769
        %1159 = vmatmul.mubr.bf16.gmra.mrb[0].mxu0 %v768
        %v1160 = vpop.f32.mrb[0].mxu0
        %v1161 = vadd.f32 0.0, %v1160
        %v1162 = vpop.f32.mrb[0].mxu0
        %v1163 = vpop.f32.mrb[0].mxu0
        %v1164 = vadd.f32 0.0, %v1163
        %v1165 = vpop.f32.mrb[0].mxu0
        %1166 = vmatprep.mubr.bf16.mxu0 %v771
        %1167 = vmatmul.mubr.bf16.gmra.mrb[0].mxu0 %v770
        %v1168 = vpop.f32.mrb[0].mxu0
        %v1169 = vadd.f32 0.0, %v1168
        %v1170 = vpop.f32.mrb[0].mxu0
        %v1171 = vpop.f32.mrb[0].mxu0
        %v1172 = vadd.f32 0.0, %v1171
        %v1173 = vpop.f32.mrb[0].mxu0
        %1174 = vmatprep.mubr.bf16.mxu0 %v773
        %1175 = vmatmul.mubr.bf16.gmra.mrb[0].mxu0 %v772
        %v1176 = vpop.f32.mrb[0].mxu0
        %v1177 = vadd.f32 0.0, %v1176
        %v1178 = vpop.f32.mrb[0].mxu0
        %v1179 = vpop.f32.mrb[0].mxu0
        %v1180 = vadd.f32 0.0, %v1179
        %v1181 = vpop.f32.mrb[0].mxu0
        %1182 = vmatprep.mubr.bf16.mxu0 %v775
        %1183 = vmatmul.mubr.bf16.gmra.mrb[0].mxu0 %v774
        %v1184 = vpop.f32.mrb[0].mxu0
        %v1185 = vadd.f32 0.0, %v1184
        %v1186 = vpop.f32.mrb[0].mxu0
        %v1187 = vpop.f32.mrb[0].mxu0
        %v1188 = vadd.f32 0.0, %v1187
        %v1189 = vpop.f32.mrb[0].mxu0
        %1190 = vmatprep.mubr.bf16.mxu0 %v777
        %1191 = vmatmul.mubr.bf16.gmra.mrb[0].mxu0 %v776
        %v1192 = vpop.f32.mrb[0].mxu0
        %v1193 = vadd.f32 0.0, %v1192
        %v1194 = vpop.f32.mrb[0].mxu0
        %v1195 = vpop.f32.mrb[0].mxu0
        %v1196 = vadd.f32 0.0, %v1195
        %v1197 = vpop.f32.mrb[0].mxu0
        %1198 = vmatprep.mubr.bf16.mxu0 %v779
        %1199 = vmatmul.mubr.bf16.gmra.mrb[0].mxu0 %v778
        %v1200 = vpop.f32.mrb[0].mxu0
        %v1201 = vadd.f32 0.0, %v1200
        %v1202 = vpop.f32.mrb[0].mxu0
        %v1203 = vpop.f32.mrb[0].mxu0
        %v1204 = vadd.f32 0.0, %v1203
        %v1205 = vpop.f32.mrb[0].mxu0
        %1206 = vmatprep.mubr.bf16.mxu0 %v781
        %1207 = vmatmul.mubr.bf16.gmra.mrb[0].mxu0 %v780
        %v1208 = vpop.f32.mrb[0].mxu0
        %v1209 = vadd.f32 0.0, %v1208
        %v1210 = vpop.f32.mrb[0].mxu0
        %v1211 = vpop.f32.mrb[0].mxu0
        %v1212 = vadd.f32 0.0, %v1211
        %v1213 = vpop.f32.mrb[0].mxu0
        %1214 = vmatprep.mubr.bf16.mxu0 %v783
        %1215 = vmatmul.mubr.bf16.gmra.mrb[0].mxu0 %v782
        %v1216 = vpop.f32.mrb[0].mxu0
        %v1217 = vadd.f32 0.0, %v1216
        %v1218 = vpop.f32.mrb[0].mxu0
        %v1219 = vpop.f32.mrb[0].mxu0
        %v1220 = vadd.f32 0.0, %v1219
        %v1221 = vpop.f32.mrb[0].mxu0
        %1222 = vmatprep.mubr.bf16.mxu0 %v785
        %1223 = vmatmul.mubr.bf16.gmra.mrb[0].mxu0 %v784
        %v1224 = vpop.f32.mrb[0].mxu0
        %v1225 = vadd.f32 0.0, %v1224
        %v1226 = vpop.f32.mrb[0].mxu0
        %v1227 = vpop.f32.mrb[0].mxu0
        %v1228 = vadd.f32 0.0, %v1227
        %v1229 = vpop.f32.mrb[0].mxu0
        %1230 = vmatprep.mubr.bf16.mxu0 %v787
        %1231 = vmatmul.mubr.bf16.gmra.mrb[0].mxu0 %v786
        %v1232 = vpop.f32.mrb[0].mxu0
        %v1233 = vadd.f32 0.0, %v1232
        %v1234 = vpop.f32.mrb[0].mxu0
        %v1235 = vpop.f32.mrb[0].mxu0
        %v1236 = vadd.f32 0.0, %v1235
        %v1237 = vpop.f32.mrb[0].mxu0
        %1238 = vmatprep.mubr.bf16.mxu0 %v789
        %1239 = vmatmul.mubr.bf16.gmra.mrb[0].mxu0 %v788
        %v1240 = vpop.f32.mrb[0].mxu0
        %v1241 = vadd.f32 0.0, %v1240
        %v1242 = vpop.f32.mrb[0].mxu0
        %v1243 = vpop.f32.mrb[0].mxu0
        %v1244 = vadd.f32 0.0, %v1243
        %v1245 = vpop.f32.mrb[0].mxu0
        %1246 = vmatprep.mubr.bf16.mxu0 %v791
        %1247 = vmatmul.mubr.bf16.gmra.mrb[0].mxu0 %v790
        %v1248 = vpop.f32.mrb[0].mxu0
        %v1249 = vadd.f32 0.0, %v1248
        %v1250 = vpop.f32.mrb[0].mxu0
        %v1251 = vpop.f32.mrb[0].mxu0
        %v1252 = vadd.f32 0.0, %v1251
        %v1253 = vpop.f32.mrb[0].mxu0
        %1254 = vmatprep.mubr.bf16.mxu0 %v793
        %1255 = vmatmul.mubr.bf16.gmra.mrb[0].mxu0 %v792
        %v1256 = vpop.f32.mrb[0].mxu0
        %v1257 = vadd.f32 0.0, %v1256
        %v1258 = vpop.f32.mrb[0].mxu0
        %v1259 = vpop.f32.mrb[0].mxu0
        %v1260 = vadd.f32 0.0, %v1259
        %v1261 = vpop.f32.mrb[0].mxu0
        %1262 = vmatprep.mubr.bf16.mxu0 %v795
        %1263 = vmatmul.mubr.bf16.gmra.mrb[0].mxu0 %v794
        %v1264 = vpop.f32.mrb[0].mxu0
        %v1265 = vadd.f32 0.0, %v1264
        %v1266 = vpop.f32.mrb[0].mxu0
        %v1267 = vpop.f32.mrb[0].mxu0
        %v1268 = vadd.f32 0.0, %v1267
        %v1269 = vpop.f32.mrb[0].mxu0
        %1270 = vmatprep.mubr.bf16.mxu0 %v797
        %1271 = vmatmul.mubr.bf16.gmra.mrb[0].mxu0 %v796
        %v1272 = vpop.f32.mrb[0].mxu0
        %v1273 = vadd.f32 0.0, %v1272
        %v1274 = vpop.f32.mrb[0].mxu0
        %v1275 = vpop.f32.mrb[0].mxu0
        %v1276 = vadd.f32 0.0, %v1275
        %v1277 = vpop.f32.mrb[0].mxu0
        %1278 = vmatprep.mubr.bf16.mxu0 %v799
        %1279 = vmatmul.mubr.bf16.gmra.mrb[0].mxu0 %v798
        %v1280 = vpop.f32.mrb[0].mxu0
        %v1281 = vadd.f32 0.0, %v1280
        %v1282 = vpop.f32.mrb[0].mxu0
        %v1283 = vpop.f32.mrb[0].mxu0
        %v1284 = vadd.f32 0.0, %v1283
        %v1285 = vpop.f32.mrb[0].mxu0
        %1286 = vmatprep.mubr.bf16.mxu0 %v801
        %1287 = vmatmul.mubr.bf16.gmra.mrb[0].mxu0 %v800
        %v1288 = vpop.f32.mrb[0].mxu0
        %v1289 = vadd.f32 0.0, %v1288
        %v1290 = vpop.f32.mrb[0].mxu0
        %v1291 = vpop.f32.mrb[0].mxu0
        %v1292 = vadd.f32 0.0, %v1291
        %v1293 = vpop.f32.mrb[0].mxu0
        %1294 = vmatprep.mubr.bf16.mxu0 %v803
        %1295 = vmatmul.mubr.bf16.gmra.mrb[0].mxu0 %v802
        %v1296 = vpop.f32.mrb[0].mxu0
        %v1297 = vadd.f32 0.0, %v1296
        %v1298 = vpop.f32.mrb[0].mxu0
        %v1299 = vpop.f32.mrb[0].mxu0
        %v1300 = vadd.f32 0.0, %v1299
        %v1301 = vpop.f32.mrb[0].mxu0
        %1302 = vmatprep.mubr.bf16.mxu0 %v805
        %1303 = vmatmul.mubr.bf16.gmra.mrb[0].mxu0 %v804
        %v1304 = vpop.f32.mrb[0].mxu0
        %v1305 = vadd.f32 0.0, %v1304
        %v1306 = vpop.f32.mrb[0].mxu0
        %v1307 = vpop.f32.mrb[0].mxu0
        %v1308 = vadd.f32 0.0, %v1307
        %v1309 = vpop.f32.mrb[0].mxu0
        %1310 = vmatprep.mubr.bf16.mxu0 %v807
        %1311 = vmatmul.mubr.bf16.gmra.mrb[0].mxu0 %v806
        %v1312 = vpop.f32.mrb[0].mxu0
        %v1313 = vadd.f32 0.0, %v1312
        %v1314 = vpop.f32.mrb[0].mxu0
        %v1315 = vpop.f32.mrb[0].mxu0
        %v1316 = vadd.f32 0.0, %v1315
        %v1317 = vpop.f32.mrb[0].mxu0
        %1318 = vmatprep.mubr.bf16.mxu0 %v809
        %1319 = vmatmul.mubr.bf16.gmra.mrb[0].mxu0 %v808
        %v1320 = vpop.f32.mrb[0].mxu0
        %v1321 = vadd.f32 0.0, %v1320
        %v1322 = vpop.f32.mrb[0].mxu0
        %v1323 = vpop.f32.mrb[0].mxu0
        %v1324 = vadd.f32 0.0, %v1323
        %v1325 = vpop.f32.mrb[0].mxu0
        %1326 = vmatprep.mubr.bf16.mxu0 %v811
        %1327 = vmatmul.mubr.bf16.gmra.mrb[0].mxu0 %v810
        %v1328 = vpop.f32.mrb[0].mxu0
        %v1329 = vadd.f32 0.0, %v1328
        %v1330 = vpop.f32.mrb[0].mxu0
        %v1331 = vpop.f32.mrb[0].mxu0
        %v1332 = vadd.f32 0.0, %v1331
        %v1333 = vpop.f32.mrb[0].mxu0
        %1334 = vmatprep.mubr.bf16.mxu0 %v813
        %1335 = vmatmul.mubr.bf16.gmra.mrb[0].mxu0 %v812
        %v1336 = vpop.f32.mrb[0].mxu0
        %v1337 = vadd.f32 0.0, %v1336
        %v1338 = vpop.f32.mrb[0].mxu0
        %v1339 = vpop.f32.mrb[0].mxu0
        %v1340 = vadd.f32 0.0, %v1339
        %v1341 = vpop.f32.mrb[0].mxu0
        %1342 = vmatprep.mubr.bf16.mxu0 %v815
        %1343 = vmatmul.mubr.bf16.gmra.mrb[0].mxu0 %v814
        %v1344 = vpop.f32.mrb[0].mxu0
        %v1345 = vadd.f32 0.0, %v1344
        %v1346 = vpop.f32.mrb[0].mxu0
        %v1347 = vpop.f32.mrb[0].mxu0
        %v1348 = vadd.f32 0.0, %v1347
        %v1349 = vpop.f32.mrb[0].mxu0
        %1350 = vmatprep.mubr.bf16.mxu0 %v817
        %1351 = vmatmul.mubr.bf16.gmra.mrb[0].mxu0 %v816
        %v1352 = vpop.f32.mrb[0].mxu0
        %v1353 = vadd.f32 0.0, %v1352
        %v1354 = vpop.f32.mrb[0].mxu0
        %v1355 = vpop.f32.mrb[0].mxu0
        %v1356 = vadd.f32 0.0, %v1355
        %v1357 = vpop.f32.mrb[0].mxu0
        %1358 = vmatprep.mubr.bf16.mxu0 %v819
        %1359 = vmatmul.mubr.bf16.gmra.mrb[0].mxu0 %v818
        %v1360 = vpop.f32.mrb[0].mxu0
        %v1361 = vadd.f32 0.0, %v1360
        %v1362 = vpop.f32.mrb[0].mxu0
        %v1363 = vpop.f32.mrb[0].mxu0
        %v1364 = vadd.f32 0.0, %v1363
        %v1365 = vpop.f32.mrb[0].mxu0
        %1366 = vmatprep.mubr.bf16.mxu0 %v821
        %1367 = vmatmul.mubr.bf16.gmra.mrb[0].mxu0 %v820
        %v1368 = vpop.f32.mrb[0].mxu0
        %v1369 = vadd.f32 0.0, %v1368
        %v1370 = vpop.f32.mrb[0].mxu0
        %v1371 = vpop.f32.mrb[0].mxu0
        %v1372 = vadd.f32 0.0, %v1371
        %v1373 = vpop.f32.mrb[0].mxu0
        %1374 = vmatprep.mubr.bf16.mxu0 %v823
        %1375 = vmatmul.mubr.bf16.gmra.mrb[0].mxu0 %v822
        %v1376 = vpop.f32.mrb[0].mxu0
        %v1377 = vadd.f32 0.0, %v1376
        %v1378 = vpop.f32.mrb[0].mxu0
        %v1379 = vpop.f32.mrb[0].mxu0
        %v1380 = vadd.f32 0.0, %v1379
        %v1381 = vpop.f32.mrb[0].mxu0
        %1382 = vmatprep.mubr.bf16.mxu0 %v825
        %1383 = vmatmul.mubr.bf16.gmra.mrb[0].mxu0 %v824
        %v1384 = vpop.f32.mrb[0].mxu0
        %v1385 = vadd.f32 0.0, %v1384
        %v1386 = vpop.f32.mrb[0].mxu0
        %v1387 = vpop.f32.mrb[0].mxu0
        %v1388 = vadd.f32 0.0, %v1387
        %v1389 = vpop.f32.mrb[0].mxu0
        %1390 = vmatprep.mubr.bf16.mxu0 %v827
        %1391 = vmatmul.mubr.bf16.gmra.mrb[0].mxu0 %v826
        %v1392 = vpop.f32.mrb[0].mxu0
        %v1393 = vadd.f32 0.0, %v1392
        %v1394 = vpop.f32.mrb[0].mxu0
        %v1395 = vpop.f32.mrb[0].mxu0
        %v1396 = vadd.f32 0.0, %v1395
        %v1397 = vpop.f32.mrb[0].mxu0
        %1398 = vmatprep.mubr.bf16.mxu0 %v829
        %1399 = vmatmul.mubr.bf16.gmra.mrb[0].mxu0 %v828
        %v1400 = vpop.f32.mrb[0].mxu0
        %v1401 = vadd.f32 0.0, %v1400
        %v1402 = vpop.f32.mrb[0].mxu0
        %v1403 = vpop.f32.mrb[0].mxu0
        %v1404 = vadd.f32 0.0, %v1403
        %v1405 = vpop.f32.mrb[0].mxu0
        %1406 = vmatprep.mubr.bf16.mxu0 %v831
        %1407 = vmatmul.mubr.bf16.gmra.mrb[0].mxu0 %v830
        %v1408 = vpop.f32.mrb[0].mxu0
        %v1409 = vadd.f32 0.0, %v1408
        %v1410 = vpop.f32.mrb[0].mxu0
        %v1411 = vpop.f32.mrb[0].mxu0
        %v1412 = vadd.f32 0.0, %v1411
        %v1413 = vpop.f32.mrb[0].mxu0
        %1414 = vmatprep.mubr.bf16.mxu0 %v833
        %1415 = vmatmul.mubr.bf16.gmra.mrb[0].mxu0 %v832
        %v1416 = vpop.f32.mrb[0].mxu0
        %v1417 = vadd.f32 0.0, %v1416
        %v1418 = vpop.f32.mrb[0].mxu0
        %v1419 = vpop.f32.mrb[0].mxu0
        %v1420 = vadd.f32 0.0, %v1419
        %v1421 = vpop.f32.mrb[0].mxu0
        %1422 = vmatprep.mubr.bf16.mxu0 %v835
        %1423 = vmatmul.mubr.bf16.gmra.mrb[0].mxu0 %v834
        %v1424 = vpop.f32.mrb[0].mxu0
        %v1425 = vadd.f32 0.0, %v1424
        %v1426 = vpop.f32.mrb[0].mxu0
        %v1427 = vpop.f32.mrb[0].mxu0
        %v1428 = vadd.f32 0.0, %v1427
        %v1429 = vpop.f32.mrb[0].mxu0
        %1430 = vmatprep.mubr.bf16.mxu0 %v837
        %1431 = vmatmul.mubr.bf16.gmra.mrb[0].mxu0 %v836
        %v1432 = vpop.f32.mrb[0].mxu0
        %v1433 = vadd.f32 0.0, %v1432
        %v1434 = vpop.f32.mrb[0].mxu0
        %v1435 = vpop.f32.mrb[0].mxu0
        %v1436 = vadd.f32 0.0, %v1435
        %v1437 = vpop.f32.mrb[0].mxu0
        %1438 = vmatprep.mubr.bf16.mxu0 %v839
        %1439 = vmatmul.mubr.bf16.gmra.mrb[0].mxu0 %v838
        %v1440 = vpop.f32.mrb[0].mxu0
        %v1441 = vadd.f32 0.0, %v1440
        %v1442 = vpop.f32.mrb[0].mxu0
        %v1443 = vpop.f32.mrb[0].mxu0
        %v1444 = vadd.f32 0.0, %v1443
        %v1445 = vpop.f32.mrb[0].mxu0
        %1446 = vmatprep.mubr.bf16.mxu0 %v841
        %1447 = vmatmul.mubr.bf16.gmra.mrb[0].mxu0 %v840
        %v1448 = vpop.f32.mrb[0].mxu0
        %v1449 = vadd.f32 0.0, %v1448
        %v1450 = vpop.f32.mrb[0].mxu0
        %v1451 = vpop.f32.mrb[0].mxu0
        %v1452 = vadd.f32 0.0, %v1451
        %v1453 = vpop.f32.mrb[0].mxu0
        %1454 = vmatprep.mubr.bf16.mxu0 %v843
        %1455 = vmatmul.mubr.bf16.gmra.mrb[0].mxu0 %v842
        %v1456 = vpop.f32.mrb[0].mxu0
        %v1457 = vadd.f32 0.0, %v1456
        %v1458 = vpop.f32.mrb[0].mxu0
        %v1459 = vpop.f32.mrb[0].mxu0
        %v1460 = vadd.f32 0.0, %v1459
        %v1461 = vpop.f32.mrb[0].mxu0
        %1462 = vmatprep.mubr.bf16.mxu0 %v845
        %1463 = vmatmul.mubr.bf16.gmra.mrb[0].mxu0 %v844
        %v1464 = vpop.f32.mrb[0].mxu0
        %v1465 = vadd.f32 0.0, %v1464
        %v1466 = vpop.f32.mrb[0].mxu0
        %v1467 = vpop.f32.mrb[0].mxu0
        %v1468 = vadd.f32 0.0, %v1467
        %v1469 = vpop.f32.mrb[0].mxu0
        %1470 = vmatprep.mubr.bf16.mxu0 %v847
        %1471 = vmatmul.mubr.bf16.gmra.mrb[0].mxu0 %v846
        %v1472 = vpop.f32.mrb[0].mxu0
        %v1473 = vadd.f32 0.0, %v1472
        %v1474 = vpop.f32.mrb[0].mxu0
        %v1475 = vpop.f32.mrb[0].mxu0
        %v1476 = vadd.f32 0.0, %v1475
        %v1477 = vpop.f32.mrb[0].mxu0
        %1478 = vmatprep.mubr.bf16.mxu0 %v849
        %1479 = vmatmul.mubr.bf16.gmra.mrb[0].mxu0 %v848
        %v1480 = vpop.f32.mrb[0].mxu0
        %v1481 = vadd.f32 0.0, %v1480
        %v1482 = vpop.f32.mrb[0].mxu0
        %v1483 = vpop.f32.mrb[0].mxu0
        %v1484 = vadd.f32 0.0, %v1483
        %v1485 = vpop.f32.mrb[0].mxu0
        %1486 = vmatprep.mubr.bf16.mxu0 %v851
        %1487 = vmatmul.mubr.bf16.gmra.mrb[0].mxu0 %v850
        %v1488 = vpop.f32.mrb[0].mxu0
        %v1489 = vadd.f32 0.0, %v1488
        %v1490 = vpop.f32.mrb[0].mxu0
        %v1491 = vpop.f32.mrb[0].mxu0
        %v1492 = vadd.f32 0.0, %v1491
        %v1493 = vpop.f32.mrb[0].mxu0
        %1494 = vmatprep.mubr.bf16.mxu0 %v853
        %1495 = vmatmul.mubr.bf16.gmra.mrb[0].mxu0 %v852
        %v1496 = vpop.f32.mrb[0].mxu0
        %v1497 = vadd.f32 0.0, %v1496
        %v1498 = vpop.f32.mrb[0].mxu0
        %v1499 = vpop.f32.mrb[0].mxu0
        %v1500 = vadd.f32 0.0, %v1499
        %v1501 = vpop.f32.mrb[0].mxu0
        %1502 = vmatprep.mubr.bf16.mxu0 %v855
        %1503 = vmatmul.mubr.bf16.gmra.mrb[0].mxu0 %v854
        %v1504 = vpop.f32.mrb[0].mxu0
        %v1505 = vadd.f32 0.0, %v1504
        %v1506 = vpop.f32.mrb[0].mxu0
        %v1507 = vpop.f32.mrb[0].mxu0
        %v1508 = vadd.f32 0.0, %v1507
        %v1509 = vpop.f32.mrb[0].mxu0
        %1510 = vmatprep.mubr.bf16.mxu0 %v857
        %1511 = vmatmul.mubr.bf16.gmra.mrb[0].mxu0 %v856
        %v1512 = vpop.f32.mrb[0].mxu0
        %v1513 = vadd.f32 0.0, %v1512
        %v1514 = vpop.f32.mrb[0].mxu0
        %v1515 = vpop.f32.mrb[0].mxu0
        %v1516 = vadd.f32 0.0, %v1515
        %v1517 = vpop.f32.mrb[0].mxu0
        %1518 = vmatprep.mubr.bf16.mxu0 %v859
        %1519 = vmatmul.mubr.bf16.gmra.mrb[0].mxu0 %v858
        %v1520 = vpop.f32.mrb[0].mxu0
        %v1521 = vadd.f32 0.0, %v1520
        %v1522 = vpop.f32.mrb[0].mxu0
        %v1523 = vpop.f32.mrb[0].mxu0
        %v1524 = vadd.f32 0.0, %v1523
        %v1525 = vpop.f32.mrb[0].mxu0
        %1526 = vmatprep.mubr.bf16.mxu0 %v861
        %1527 = vmatmul.mubr.bf16.gmra.mrb[0].mxu0 %v860
        %v1528 = vpop.f32.mrb[0].mxu0
        %v1529 = vadd.f32 0.0, %v1528
        %v1530 = vpop.f32.mrb[0].mxu0
        %v1531 = vpop.f32.mrb[0].mxu0
        %v1532 = vadd.f32 0.0, %v1531
        %v1533 = vpop.f32.mrb[0].mxu0
        %1534 = vmatprep.mubr.bf16.mxu0 %v863
        %1535 = vmatmul.mubr.bf16.gmra.mrb[0].mxu0 %v862
        %v1536 = vpop.f32.mrb[0].mxu0
        %v1537 = vadd.f32 0.0, %v1536
        %v1538 = vpop.f32.mrb[0].mxu0
        %v1539 = vpop.f32.mrb[0].mxu0
        %v1540 = vadd.f32 0.0, %v1539
        %v1541 = vpop.f32.mrb[0].mxu0
        %1542 = vmatprep.mubr.bf16.mxu0 %v865
        %1543 = vmatmul.mubr.bf16.gmra.mrb[0].mxu0 %v864
        %v1544 = vpop.f32.mrb[0].mxu0
        %v1545 = vadd.f32 0.0, %v1544
        %v1546 = vpop.f32.mrb[0].mxu0
        %v1547 = vpop.f32.mrb[0].mxu0
        %v1548 = vadd.f32 0.0, %v1547
        %v1549 = vpop.f32.mrb[0].mxu0
        %1550 = vmatprep.mubr.bf16.mxu0 %v867
        %1551 = vmatmul.mubr.bf16.gmra.mrb[0].mxu0 %v866
        %v1552 = vpop.f32.mrb[0].mxu0
        %v1553 = vadd.f32 0.0, %v1552
        %v1554 = vpop.f32.mrb[0].mxu0
        %v1555 = vpop.f32.mrb[0].mxu0
        %v1556 = vadd.f32 0.0, %v1555
        %v1557 = vpop.f32.mrb[0].mxu0
        %1558 = vmatprep.mubr.bf16.mxu0 %v869
        %1559 = vmatmul.mubr.bf16.gmra.mrb[0].mxu0 %v868
        %v1560 = vpop.f32.mrb[0].mxu0
        %v1561 = vadd.f32 0.0, %v1560
        %v1562 = vpop.f32.mrb[0].mxu0
        %v1563 = vpop.f32.mrb[0].mxu0
        %v1564 = vadd.f32 0.0, %v1563
        %v1565 = vpop.f32.mrb[0].mxu0
        %1566 = vmatprep.mubr.bf16.mxu0 %v871
        %1567 = vmatmul.mubr.bf16.gmra.mrb[0].mxu0 %v870
        %v1568 = vpop.f32.mrb[0].mxu0
        %v1569 = vadd.f32 0.0, %v1568
        %v1570 = vpop.f32.mrb[0].mxu0
        %v1571 = vpop.f32.mrb[0].mxu0
        %v1572 = vadd.f32 0.0, %v1571
        %v1573 = vpop.f32.mrb[0].mxu0
        %1574 = vmatprep.mubr.bf16.mxu0 %v873
        %1575 = vmatmul.mubr.bf16.gmra.mrb[0].mxu0 %v872
        %v1576 = vpop.f32.mrb[0].mxu0
        %v1577 = vadd.f32 0.0, %v1576
        %v1578 = vpop.f32.mrb[0].mxu0
        %v1579 = vpop.f32.mrb[0].mxu0
        %v1580 = vadd.f32 0.0, %v1579
        %v1581 = vpop.f32.mrb[0].mxu0
        %1582 = vmatprep.mubr.bf16.mxu0 %v875
        %1583 = vmatmul.mubr.bf16.gmra.mrb[0].mxu0 %v874
        %v1584 = vpop.f32.mrb[0].mxu0
        %v1585 = vadd.f32 0.0, %v1584
        %v1586 = vpop.f32.mrb[0].mxu0
        %v1587 = vpop.f32.mrb[0].mxu0
        %v1588 = vadd.f32 0.0, %v1587
        %v1589 = vpop.f32.mrb[0].mxu0
        %1590 = vmatprep.mubr.bf16.mxu0 %v877
        %1591 = vmatmul.mubr.bf16.gmra.mrb[0].mxu0 %v876
        %v1592 = vpop.f32.mrb[0].mxu0
        %v1593 = vadd.f32 0.0, %v1592
        %v1594 = vpop.f32.mrb[0].mxu0
        %v1595 = vpop.f32.mrb[0].mxu0
        %v1596 = vadd.f32 0.0, %v1595
        %v1597 = vpop.f32.mrb[0].mxu0
        %1598 = vmatprep.mubr.bf16.mxu0 %v879
        %1599 = vmatmul.mubr.bf16.gmra.mrb[0].mxu0 %v878
        %v1600 = vpop.f32.mrb[0].mxu0
        %v1601 = vadd.f32 0.0, %v1600
        %v1602 = vpop.f32.mrb[0].mxu0
        %v1603 = vpop.f32.mrb[0].mxu0
        %v1604 = vadd.f32 0.0, %v1603
        %v1605 = vpop.f32.mrb[0].mxu0
        %1606 = vmatprep.mubr.bf16.mxu0 %v881
        %1607 = vmatmul.mubr.bf16.gmra.mrb[0].mxu0 %v880
        %v1608 = vpop.f32.mrb[0].mxu0
        %v1609 = vadd.f32 0.0, %v1608
        %v1610 = vpop.f32.mrb[0].mxu0
        %v1611 = vpop.f32.mrb[0].mxu0
        %v1612 = vadd.f32 0.0, %v1611
        %v1613 = vpop.f32.mrb[0].mxu0
        %1614 = vmatprep.mubr.bf16.mxu0 %v883
        %1615 = vmatmul.mubr.bf16.gmra.mrb[0].mxu0 %v882
        %v1616 = vpop.f32.mrb[0].mxu0
        %v1617 = vadd.f32 0.0, %v1616
        %v1618 = vpop.f32.mrb[0].mxu0
        %v1619 = vpop.f32.mrb[0].mxu0
        %v1620 = vadd.f32 0.0, %v1619
        %v1621 = vpop.f32.mrb[0].mxu0
        %1622 = vmatprep.mubr.bf16.mxu0 %v885
        %1623 = vmatmul.mubr.bf16.gmra.mrb[0].mxu0 %v884
        %v1624 = vpop.f32.mrb[0].mxu0
        %v1625 = vadd.f32 0.0, %v1624
        %v1626 = vpop.f32.mrb[0].mxu0
        %v1627 = vpop.f32.mrb[0].mxu0
        %v1628 = vadd.f32 0.0, %v1627
        %v1629 = vpop.f32.mrb[0].mxu0
        %1630 = vmatprep.mubr.bf16.mxu0 %v887
        %1631 = vmatmul.mubr.bf16.gmra.mrb[0].mxu0 %v886
        %v1632 = vpop.f32.mrb[0].mxu0
        %v1633 = vadd.f32 0.0, %v1632
        %v1634 = vpop.f32.mrb[0].mxu0
        %v1635 = vpop.f32.mrb[0].mxu0
        %v1636 = vadd.f32 0.0, %v1635
        %v1637 = vpop.f32.mrb[0].mxu0
        %1638 = vmatprep.mubr.bf16.mxu0 %v889
        %1639 = vmatmul.mubr.bf16.gmra.mrb[0].mxu0 %v888
        %v1640 = vpop.f32.mrb[0].mxu0
        %v1641 = vadd.f32 0.0, %v1640
        %v1642 = vpop.f32.mrb[0].mxu0
        %v1643 = vpop.f32.mrb[0].mxu0
        %v1644 = vadd.f32 0.0, %v1643
        %v1645 = vpop.f32.mrb[0].mxu0
        %1646 = vmatprep.mubr.bf16.mxu0 %v891
        %1647 = vmatmul.mubr.bf16.gmra.mrb[0].mxu0 %v890
        %v1648 = vpop.f32.mrb[0].mxu0
        %v1649 = vadd.f32 0.0, %v1648
        %v1650 = vpop.f32.mrb[0].mxu0
        %v1651 = vpop.f32.mrb[0].mxu0
        %v1652 = vadd.f32 0.0, %v1651
        %v1653 = vpop.f32.mrb[0].mxu0
        %1654 = vmatprep.mubr.bf16.mxu0 %v893
        %1655 = vmatmul.mubr.bf16.gmra.mrb[0].mxu0 %v892
        %v1656 = vpop.f32.mrb[0].mxu0
        %v1657 = vadd.f32 0.0, %v1656
        %v1658 = vpop.f32.mrb[0].mxu0
        %v1659 = vpop.f32.mrb[0].mxu0
        %v1660 = vadd.f32 0.0, %v1659
        %v1661 = vpop.f32.mrb[0].mxu0
        %1662 = vdwg.mxu0
        %v1663 = vld [vmem:[%s2] sm:$0x1]
        %v1665 = vlaneseq
        %v1666 = vshrl.u32 %v1665, 7
        %v1667 = vsub.s32 0, %v1666
        %v1668 = vrot.slane %v1663, %v1667
        %v1670 = vmul.f32 %v1153, %v1668
        %v1671 = vmul.f32 %v1156, %v1668
        %v1672 = vmul.f32 %v1161, %v1668
        %v1673 = vmul.f32 %v1164, %v1668
        %v1674 = vmul.f32 %v1169, %v1668
        %v1675 = vmul.f32 %v1172, %v1668
        %v1676 = vmul.f32 %v1177, %v1668
        %v1677 = vmul.f32 %v1180, %v1668
        %v1678 = vmul.f32 %v1185, %v1668
        %v1679 = vmul.f32 %v1188, %v1668
        %v1680 = vmul.f32 %v1193, %v1668
        %v1681 = vmul.f32 %v1196, %v1668
        %v1682 = vmul.f32 %v1201, %v1668
        %v1683 = vmul.f32 %v1204, %v1668
        %v1684 = vmul.f32 %v1209, %v1668
        %v1685 = vmul.f32 %v1212, %v1668
        %v1686 = vmul.f32 %v1217, %v1668
        %v1687 = vmul.f32 %v1220, %v1668
        %v1688 = vmul.f32 %v1225, %v1668
        %v1689 = vmul.f32 %v1228, %v1668
        %v1690 = vmul.f32 %v1233, %v1668
        %v1691 = vmul.f32 %v1236, %v1668
        %v1692 = vmul.f32 %v1241, %v1668
        %v1693 = vmul.f32 %v1244, %v1668
        %v1694 = vmul.f32 %v1249, %v1668
        %v1695 = vmul.f32 %v1252, %v1668
        %v1696 = vmul.f32 %v1257, %v1668
        %v1697 = vmul.f32 %v1260, %v1668
        %v1698 = vmul.f32 %v1265, %v1668
        %v1699 = vmul.f32 %v1268, %v1668
        %v1700 = vmul.f32 %v1273, %v1668
        %v1701 = vmul.f32 %v1276, %v1668
        %v1702 = vmul.f32 %v1281, %v1668
        %v1703 = vmul.f32 %v1284, %v1668
        %v1704 = vmul.f32 %v1289, %v1668
        %v1705 = vmul.f32 %v1292, %v1668
        %v1706 = vmul.f32 %v1297, %v1668
        %v1707 = vmul.f32 %v1300, %v1668
        %v1708 = vmul.f32 %v1305, %v1668
        %v1709 = vmul.f32 %v1308, %v1668
        %v1710 = vmul.f32 %v1313, %v1668
        %v1711 = vmul.f32 %v1316, %v1668
        %v1712 = vmul.f32 %v1321, %v1668
        %v1713 = vmul.f32 %v1324, %v1668
        %v1714 = vmul.f32 %v1329, %v1668
        %v1715 = vmul.f32 %v1332, %v1668
        %v1716 = vmul.f32 %v1337, %v1668
        %v1717 = vmul.f32 %v1340, %v1668
        %v1718 = vmul.f32 %v1345, %v1668
        %v1719 = vmul.f32 %v1348, %v1668
        %v1720 = vmul.f32 %v1353, %v1668
        %v1721 = vmul.f32 %v1356, %v1668
        %v1722 = vmul.f32 %v1361, %v1668
        %v1723 = vmul.f32 %v1364, %v1668
        %v1724 = vmul.f32 %v1369, %v1668
        %v1725 = vmul.f32 %v1372, %v1668
        %v1726 = vmul.f32 %v1377, %v1668
        %v1727 = vmul.f32 %v1380, %v1668
        %v1728 = vmul.f32 %v1385, %v1668
        %v1729 = vmul.f32 %v1388, %v1668
        %v1730 = vmul.f32 %v1393, %v1668
        %v1731 = vmul.f32 %v1396, %v1668
        %v1732 = vmul.f32 %v1401, %v1668
        %v1733 = vmul.f32 %v1404, %v1668
        %v1734 = vmul.f32 %v1409, %v1668
        %v1735 = vmul.f32 %v1412, %v1668
        %v1736 = vmul.f32 %v1417, %v1668
        %v1737 = vmul.f32 %v1420, %v1668
        %v1738 = vmul.f32 %v1425, %v1668
        %v1739 = vmul.f32 %v1428, %v1668
        %v1740 = vmul.f32 %v1433, %v1668
        %v1741 = vmul.f32 %v1436, %v1668
        %v1742 = vmul.f32 %v1441, %v1668
        %v1743 = vmul.f32 %v1444, %v1668
        %v1744 = vmul.f32 %v1449, %v1668
        %v1745 = vmul.f32 %v1452, %v1668
        %v1746 = vmul.f32 %v1457, %v1668
        %v1747 = vmul.f32 %v1460, %v1668
        %v1748 = vmul.f32 %v1465, %v1668
        %v1749 = vmul.f32 %v1468, %v1668
        %v1750 = vmul.f32 %v1473, %v1668
        %v1751 = vmul.f32 %v1476, %v1668
        %v1752 = vmul.f32 %v1481, %v1668
        %v1753 = vmul.f32 %v1484, %v1668
        %v1754 = vmul.f32 %v1489, %v1668
        %v1755 = vmul.f32 %v1492, %v1668
        %v1756 = vmul.f32 %v1497, %v1668
        %v1757 = vmul.f32 %v1500, %v1668
        %v1758 = vmul.f32 %v1505, %v1668
        %v1759 = vmul.f32 %v1508, %v1668
        %v1760 = vmul.f32 %v1513, %v1668
        %v1761 = vmul.f32 %v1516, %v1668
        %v1762 = vmul.f32 %v1521, %v1668
        %v1763 = vmul.f32 %v1524, %v1668
        %v1764 = vmul.f32 %v1529, %v1668
        %v1765 = vmul.f32 %v1532, %v1668
        %v1766 = vmul.f32 %v1537, %v1668
        %v1767 = vmul.f32 %v1540, %v1668
        %v1768 = vmul.f32 %v1545, %v1668
        %v1769 = vmul.f32 %v1548, %v1668
        %v1770 = vmul.f32 %v1553, %v1668
        %v1771 = vmul.f32 %v1556, %v1668
        %v1772 = vmul.f32 %v1561, %v1668
        %v1773 = vmul.f32 %v1564, %v1668
        %v1774 = vmul.f32 %v1569, %v1668
        %v1775 = vmul.f32 %v1572, %v1668
        %v1776 = vmul.f32 %v1577, %v1668
        %v1777 = vmul.f32 %v1580, %v1668
        %v1778 = vmul.f32 %v1585, %v1668
        %v1779 = vmul.f32 %v1588, %v1668
        %v1780 = vmul.f32 %v1593, %v1668
        %v1781 = vmul.f32 %v1596, %v1668
        %v1782 = vmul.f32 %v1601, %v1668
        %v1783 = vmul.f32 %v1604, %v1668
        %v1784 = vmul.f32 %v1609, %v1668
        %v1785 = vmul.f32 %v1612, %v1668
        %v1786 = vmul.f32 %v1617, %v1668
        %v1787 = vmul.f32 %v1620, %v1668
        %v1788 = vmul.f32 %v1625, %v1668
        %v1789 = vmul.f32 %v1628, %v1668
        %v1790 = vmul.f32 %v1633, %v1668
        %v1791 = vmul.f32 %v1636, %v1668
        %v1792 = vmul.f32 %v1641, %v1668
        %v1793 = vmul.f32 %v1644, %v1668
        %v1794 = vmul.f32 %v1649, %v1668
        %v1795 = vmul.f32 %v1652, %v1668
        %v1796 = vmul.f32 %v1657, %v1668
        %v1797 = vmul.f32 %v1660, %v1668
        %v1798 = vld [vmem:[%s3] sm:$0x1]
        %v1800 = vlaneseq
        %v1801 = vshrl.u32 %v1800, 7
        %v1802 = vsub.s32 0, %v1801
        %v1803 = vrot.slane %v1798, %v1802
        %v1805 = vadd.f32 %v1670, %v1803
        %v1806 = vadd.f32 %v1671, %v1803
        %v1807 = vadd.f32 %v1672, %v1803
        %v1808 = vadd.f32 %v1673, %v1803
        %v1809 = vadd.f32 %v1674, %v1803
        %v1810 = vadd.f32 %v1675, %v1803
        %v1811 = vadd.f32 %v1676, %v1803
        %v1812 = vadd.f32 %v1677, %v1803
        %v1813 = vadd.f32 %v1678, %v1803
        %v1814 = vadd.f32 %v1679, %v1803
        %v1815 = vadd.f32 %v1680, %v1803
        %v1816 = vadd.f32 %v1681, %v1803
        %v1817 = vadd.f32 %v1682, %v1803
        %v1818 = vadd.f32 %v1683, %v1803
        %v1819 = vadd.f32 %v1684, %v1803
        %v1820 = vadd.f32 %v1685, %v1803
        %v1821 = vadd.f32 %v1686, %v1803
        %v1822 = vadd.f32 %v1687, %v1803
        %v1823 = vadd.f32 %v1688, %v1803
        %v1824 = vadd.f32 %v1689, %v1803
        %v1825 = vadd.f32 %v1690, %v1803
        %v1826 = vadd.f32 %v1691, %v1803
        %v1827 = vadd.f32 %v1692, %v1803
        %v1828 = vadd.f32 %v1693, %v1803
        %v1829 = vadd.f32 %v1694, %v1803
        %v1830 = vadd.f32 %v1695, %v1803
        %v1831 = vadd.f32 %v1696, %v1803
        %v1832 = vadd.f32 %v1697, %v1803
        %v1833 = vadd.f32 %v1698, %v1803
        %v1834 = vadd.f32 %v1699, %v1803
        %v1835 = vadd.f32 %v1700, %v1803
        %v1836 = vadd.f32 %v1701, %v1803
        %v1837 = vadd.f32 %v1702, %v1803
        %v1838 = vadd.f32 %v1703, %v1803
        %v1839 = vadd.f32 %v1704, %v1803
        %v1840 = vadd.f32 %v1705, %v1803
        %v1841 = vadd.f32 %v1706, %v1803
        %v1842 = vadd.f32 %v1707, %v1803
        %v1843 = vadd.f32 %v1708, %v1803
        %v1844 = vadd.f32 %v1709, %v1803
        %v1845 = vadd.f32 %v1710, %v1803
        %v1846 = vadd.f32 %v1711, %v1803
        %v1847 = vadd.f32 %v1712, %v1803
        %v1848 = vadd.f32 %v1713, %v1803
        %v1849 = vadd.f32 %v1714, %v1803
        %v1850 = vadd.f32 %v1715, %v1803
        %v1851 = vadd.f32 %v1716, %v1803
        %v1852 = vadd.f32 %v1717, %v1803
        %v1853 = vadd.f32 %v1718, %v1803
        %v1854 = vadd.f32 %v1719, %v1803
        %v1855 = vadd.f32 %v1720, %v1803
        %v1856 = vadd.f32 %v1721, %v1803
        %v1857 = vadd.f32 %v1722, %v1803
        %v1858 = vadd.f32 %v1723, %v1803
        %v1859 = vadd.f32 %v1724, %v1803
        %v1860 = vadd.f32 %v1725, %v1803
        %v1861 = vadd.f32 %v1726, %v1803
        %v1862 = vadd.f32 %v1727, %v1803
        %v1863 = vadd.f32 %v1728, %v1803
        %v1864 = vadd.f32 %v1729, %v1803
        %v1865 = vadd.f32 %v1730, %v1803
        %v1866 = vadd.f32 %v1731, %v1803
        %v1867 = vadd.f32 %v1732, %v1803
        %v1868 = vadd.f32 %v1733, %v1803
        %v1869 = vadd.f32 %v1734, %v1803
        %v1870 = vadd.f32 %v1735, %v1803
        %v1871 = vadd.f32 %v1736, %v1803
        %v1872 = vadd.f32 %v1737, %v1803
        %v1873 = vadd.f32 %v1738, %v1803
        %v1874 = vadd.f32 %v1739, %v1803
        %v1875 = vadd.f32 %v1740, %v1803
        %v1876 = vadd.f32 %v1741, %v1803
        %v1877 = vadd.f32 %v1742, %v1803
        %v1878 = vadd.f32 %v1743, %v1803
        %v1879 = vadd.f32 %v1744, %v1803
        %v1880 = vadd.f32 %v1745, %v1803
        %v1881 = vadd.f32 %v1746, %v1803
        %v1882 = vadd.f32 %v1747, %v1803
        %v1883 = vadd.f32 %v1748, %v1803
        %v1884 = vadd.f32 %v1749, %v1803
        %v1885 = vadd.f32 %v1750, %v1803
        %v1886 = vadd.f32 %v1751, %v1803
        %v1887 = vadd.f32 %v1752, %v1803
        %v1888 = vadd.f32 %v1753, %v1803
        %v1889 = vadd.f32 %v1754, %v1803
        %v1890 = vadd.f32 %v1755, %v1803
        %v1891 = vadd.f32 %v1756, %v1803
        %v1892 = vadd.f32 %v1757, %v1803
        %v1893 = vadd.f32 %v1758, %v1803
        %v1894 = vadd.f32 %v1759, %v1803
        %v1895 = vadd.f32 %v1760, %v1803
        %v1896 = vadd.f32 %v1761, %v1803
        %v1897 = vadd.f32 %v1762, %v1803
        %v1898 = vadd.f32 %v1763, %v1803
        %v1899 = vadd.f32 %v1764, %v1803
        %v1900 = vadd.f32 %v1765, %v1803
        %v1901 = vadd.f32 %v1766, %v1803
        %v1902 = vadd.f32 %v1767, %v1803
        %v1903 = vadd.f32 %v1768, %v1803
        %v1904 = vadd.f32 %v1769, %v1803
        %v1905 = vadd.f32 %v1770, %v1803
        %v1906 = vadd.f32 %v1771, %v1803
        %v1907 = vadd.f32 %v1772, %v1803
        %v1908 = vadd.f32 %v1773, %v1803
        %v1909 = vadd.f32 %v1774, %v1803
        %v1910 = vadd.f32 %v1775, %v1803
        %v1911 = vadd.f32 %v1776, %v1803
        %v1912 = vadd.f32 %v1777, %v1803
        %v1913 = vadd.f32 %v1778, %v1803
        %v1914 = vadd.f32 %v1779, %v1803
        %v1915 = vadd.f32 %v1780, %v1803
        %v1916 = vadd.f32 %v1781, %v1803
        %v1917 = vadd.f32 %v1782, %v1803
        %v1918 = vadd.f32 %v1783, %v1803
        %v1919 = vadd.f32 %v1784, %v1803
        %v1920 = vadd.f32 %v1785, %v1803
        %v1921 = vadd.f32 %v1786, %v1803
        %v1922 = vadd.f32 %v1787, %v1803
        %v1923 = vadd.f32 %v1788, %v1803
        %v1924 = vadd.f32 %v1789, %v1803
        %v1925 = vadd.f32 %v1790, %v1803
        %v1926 = vadd.f32 %v1791, %v1803
        %v1927 = vadd.f32 %v1792, %v1803
        %v1928 = vadd.f32 %v1793, %v1803
        %v1929 = vadd.f32 %v1794, %v1803
        %v1930 = vadd.f32 %v1795, %v1803
        %v1931 = vadd.f32 %v1796, %v1803
        %v1932 = vadd.f32 %v1797, %v1803
        %v1933 = vmax.f32 %v1805, 0.0
        %v1934 = vmax.f32 %v1806, 0.0
        %v1935 = vmax.f32 %v1807, 0.0
        %v1936 = vmax.f32 %v1808, 0.0
        %v1937 = vmax.f32 %v1809, 0.0
        %v1938 = vmax.f32 %v1810, 0.0
        %v1939 = vmax.f32 %v1811, 0.0
        %v1940 = vmax.f32 %v1812, 0.0
        %v1941 = vmax.f32 %v1813, 0.0
        %v1942 = vmax.f32 %v1814, 0.0
        %v1943 = vmax.f32 %v1815, 0.0
        %v1944 = vmax.f32 %v1816, 0.0
        %v1945 = vmax.f32 %v1817, 0.0
        %v1946 = vmax.f32 %v1818, 0.0
        %v1947 = vmax.f32 %v1819, 0.0
        %v1948 = vmax.f32 %v1820, 0.0
        %v1949 = vmax.f32 %v1821, 0.0
        %v1950 = vmax.f32 %v1822, 0.0
        %v1951 = vmax.f32 %v1823, 0.0
        %v1952 = vmax.f32 %v1824, 0.0
        %v1953 = vmax.f32 %v1825, 0.0
        %v1954 = vmax.f32 %v1826, 0.0
        %v1955 = vmax.f32 %v1827, 0.0
        %v1956 = vmax.f32 %v1828, 0.0
        %v1957 = vmax.f32 %v1829, 0.0
        %v1958 = vmax.f32 %v1830, 0.0
        %v1959 = vmax.f32 %v1831, 0.0
        %v1960 = vmax.f32 %v1832, 0.0
        %v1961 = vmax.f32 %v1833, 0.0
        %v1962 = vmax.f32 %v1834, 0.0
        %v1963 = vmax.f32 %v1835, 0.0
        %v1964 = vmax.f32 %v1836, 0.0
        %v1965 = vmax.f32 %v1837, 0.0
        %v1966 = vmax.f32 %v1838, 0.0
        %v1967 = vmax.f32 %v1839, 0.0
        %v1968 = vmax.f32 %v1840, 0.0
        %v1969 = vmax.f32 %v1841, 0.0
        %v1970 = vmax.f32 %v1842, 0.0
        %v1971 = vmax.f32 %v1843, 0.0
        %v1972 = vmax.f32 %v1844, 0.0
        %v1973 = vmax.f32 %v1845, 0.0
        %v1974 = vmax.f32 %v1846, 0.0
        %v1975 = vmax.f32 %v1847, 0.0
        %v1976 = vmax.f32 %v1848, 0.0
        %v1977 = vmax.f32 %v1849, 0.0
        %v1978 = vmax.f32 %v1850, 0.0
        %v1979 = vmax.f32 %v1851, 0.0
        %v1980 = vmax.f32 %v1852, 0.0
        %v1981 = vmax.f32 %v1853, 0.0
        %v1982 = vmax.f32 %v1854, 0.0
        %v1983 = vmax.f32 %v1855, 0.0
        %v1984 = vmax.f32 %v1856, 0.0
        %v1985 = vmax.f32 %v1857, 0.0
        %v1986 = vmax.f32 %v1858, 0.0
        %v1987 = vmax.f32 %v1859, 0.0
        %v1988 = vmax.f32 %v1860, 0.0
        %v1989 = vmax.f32 %v1861, 0.0
        %v1990 = vmax.f32 %v1862, 0.0
        %v1991 = vmax.f32 %v1863, 0.0
        %v1992 = vmax.f32 %v1864, 0.0
        %v1993 = vmax.f32 %v1865, 0.0
        %v1994 = vmax.f32 %v1866, 0.0
        %v1995 = vmax.f32 %v1867, 0.0
        %v1996 = vmax.f32 %v1868, 0.0
        %v1997 = vmax.f32 %v1869, 0.0
        %v1998 = vmax.f32 %v1870, 0.0
        %v1999 = vmax.f32 %v1871, 0.0
        %v2000 = vmax.f32 %v1872, 0.0
        %v2001 = vmax.f32 %v1873, 0.0
        %v2002 = vmax.f32 %v1874, 0.0
        %v2003 = vmax.f32 %v1875, 0.0
        %v2004 = vmax.f32 %v1876, 0.0
        %v2005 = vmax.f32 %v1877, 0.0
        %v2006 = vmax.f32 %v1878, 0.0
        %v2007 = vmax.f32 %v1879, 0.0
        %v2008 = vmax.f32 %v1880, 0.0
        %v2009 = vmax.f32 %v1881, 0.0
        %v2010 = vmax.f32 %v1882, 0.0
        %v2011 = vmax.f32 %v1883, 0.0
        %v2012 = vmax.f32 %v1884, 0.0
        %v2013 = vmax.f32 %v1885, 0.0
        %v2014 = vmax.f32 %v1886, 0.0
        %v2015 = vmax.f32 %v1887, 0.0
        %v2016 = vmax.f32 %v1888, 0.0
        %v2017 = vmax.f32 %v1889, 0.0
        %v2018 = vmax.f32 %v1890, 0.0
        %v2019 = vmax.f32 %v1891, 0.0
        %v2020 = vmax.f32 %v1892, 0.0
        %v2021 = vmax.f32 %v1893, 0.0
        %v2022 = vmax.f32 %v1894, 0.0
        %v2023 = vmax.f32 %v1895, 0.0
        %v2024 = vmax.f32 %v1896, 0.0
        %v2025 = vmax.f32 %v1897, 0.0
        %v2026 = vmax.f32 %v1898, 0.0
        %v2027 = vmax.f32 %v1899, 0.0
        %v2028 = vmax.f32 %v1900, 0.0
        %v2029 = vmax.f32 %v1901, 0.0
        %v2030 = vmax.f32 %v1902, 0.0
        %v2031 = vmax.f32 %v1903, 0.0
        %v2032 = vmax.f32 %v1904, 0.0
        %v2033 = vmax.f32 %v1905, 0.0
        %v2034 = vmax.f32 %v1906, 0.0
        %v2035 = vmax.f32 %v1907, 0.0
        %v2036 = vmax.f32 %v1908, 0.0
        %v2037 = vmax.f32 %v1909, 0.0
        %v2038 = vmax.f32 %v1910, 0.0
        %v2039 = vmax.f32 %v1911, 0.0
        %v2040 = vmax.f32 %v1912, 0.0
        %v2041 = vmax.f32 %v1913, 0.0
        %v2042 = vmax.f32 %v1914, 0.0
        %v2043 = vmax.f32 %v1915, 0.0
        %v2044 = vmax.f32 %v1916, 0.0
        %v2045 = vmax.f32 %v1917, 0.0
        %v2046 = vmax.f32 %v1918, 0.0
        %v2047 = vmax.f32 %v1919, 0.0
        %v2048 = vmax.f32 %v1920, 0.0
        %v2049 = vmax.f32 %v1921, 0.0
        %v2050 = vmax.f32 %v1922, 0.0
        %v2051 = vmax.f32 %v1923, 0.0
        %v2052 = vmax.f32 %v1924, 0.0
        %v2053 = vmax.f32 %v1925, 0.0
        %v2054 = vmax.f32 %v1926, 0.0
        %v2055 = vmax.f32 %v1927, 0.0
        %v2056 = vmax.f32 %v1928, 0.0
        %v2057 = vmax.f32 %v1929, 0.0
        %v2058 = vmax.f32 %v1930, 0.0
        %v2059 = vmax.f32 %v1931, 0.0
        %v2060 = vmax.f32 %v1932, 0.0
        %v2061 = vpack.c.bf16 %v1934, %v1933
        %v2062 = vpack.c.bf16 %v1936, %v1935
        %v2063 = vpack.c.bf16 %v1938, %v1937
        %v2064 = vpack.c.bf16 %v1940, %v1939
        %v2065 = vpack.c.bf16 %v1942, %v1941
        %v2066 = vpack.c.bf16 %v1944, %v1943
        %v2067 = vpack.c.bf16 %v1946, %v1945
        %v2068 = vpack.c.bf16 %v1948, %v1947
        %v2069 = vpack.c.bf16 %v1950, %v1949
        %v2070 = vpack.c.bf16 %v1952, %v1951
        %v2071 = vpack.c.bf16 %v1954, %v1953
        %v2072 = vpack.c.bf16 %v1956, %v1955
        %v2073 = vpack.c.bf16 %v1958, %v1957
        %v2074 = vpack.c.bf16 %v1960, %v1959
        %v2075 = vpack.c.bf16 %v1962, %v1961
        %v2076 = vpack.c.bf16 %v1964, %v1963
        %v2077 = vpack.c.bf16 %v1966, %v1965
        %v2078 = vpack.c.bf16 %v1968, %v1967
        %v2079 = vpack.c.bf16 %v1970, %v1969
        %v2080 = vpack.c.bf16 %v1972, %v1971
        %v2081 = vpack.c.bf16 %v1974, %v1973
        %v2082 = vpack.c.bf16 %v1976, %v1975
        %v2083 = vpack.c.bf16 %v1978, %v1977
        %v2084 = vpack.c.bf16 %v1980, %v1979
        %v2085 = vpack.c.bf16 %v1982, %v1981
        %v2086 = vpack.c.bf16 %v1984, %v1983
        %v2087 = vpack.c.bf16 %v1986, %v1985
        %v2088 = vpack.c.bf16 %v1988, %v1987
        %v2089 = vpack.c.bf16 %v1990, %v1989
        %v2090 = vpack.c.bf16 %v1992, %v1991
        %v2091 = vpack.c.bf16 %v1994, %v1993
        %v2092 = vpack.c.bf16 %v1996, %v1995
        %v2093 = vpack.c.bf16 %v1998, %v1997
        %v2094 = vpack.c.bf16 %v2000, %v1999
        %v2095 = vpack.c.bf16 %v2002, %v2001
        %v2096 = vpack.c.bf16 %v2004, %v2003
        %v2097 = vpack.c.bf16 %v2006, %v2005
        %v2098 = vpack.c.bf16 %v2008, %v2007
        %v2099 = vpack.c.bf16 %v2010, %v2009
        %v2100 = vpack.c.bf16 %v2012, %v2011
        %v2101 = vpack.c.bf16 %v2014, %v2013
        %v2102 = vpack.c.bf16 %v2016, %v2015
        %v2103 = vpack.c.bf16 %v2018, %v2017
        %v2104 = vpack.c.bf16 %v2020, %v2019
        %v2105 = vpack.c.bf16 %v2022, %v2021
        %v2106 = vpack.c.bf16 %v2024, %v2023
        %v2107 = vpack.c.bf16 %v2026, %v2025
        %v2108 = vpack.c.bf16 %v2028, %v2027
        %v2109 = vpack.c.bf16 %v2030, %v2029
        %v2110 = vpack.c.bf16 %v2032, %v2031
        %v2111 = vpack.c.bf16 %v2034, %v2033
        %v2112 = vpack.c.bf16 %v2036, %v2035
        %v2113 = vpack.c.bf16 %v2038, %v2037
        %v2114 = vpack.c.bf16 %v2040, %v2039
        %v2115 = vpack.c.bf16 %v2042, %v2041
        %v2116 = vpack.c.bf16 %v2044, %v2043
        %v2117 = vpack.c.bf16 %v2046, %v2045
        %v2118 = vpack.c.bf16 %v2048, %v2047
        %v2119 = vpack.c.bf16 %v2050, %v2049
        %v2120 = vpack.c.bf16 %v2052, %v2051
        %v2121 = vpack.c.bf16 %v2054, %v2053
        %v2122 = vpack.c.bf16 %v2056, %v2055
        %v2123 = vpack.c.bf16 %v2058, %v2057
        %v2124 = vpack.c.bf16 %v2060, %v2059
        %v2189 = vunpack.c.l.b16 %v2061
        %v2190 = vunpack.c.h.b16 %v2061
        %v2191 = vunpack.c.l.b16 %v2062
        %v2192 = vunpack.c.h.b16 %v2062
        %v2193 = vunpack.c.l.b16 %v2063
        %v2194 = vunpack.c.h.b16 %v2063
        %v2195 = vunpack.c.l.b16 %v2064
        %v2196 = vunpack.c.h.b16 %v2064
        %v2197 = vunpack.c.l.b16 %v2065
        %v2198 = vunpack.c.h.b16 %v2065
        %v2199 = vunpack.c.l.b16 %v2066
        %v2200 = vunpack.c.h.b16 %v2066
        %v2201 = vunpack.c.l.b16 %v2067
        %v2202 = vunpack.c.h.b16 %v2067
        %v2203 = vunpack.c.l.b16 %v2068
        %v2204 = vunpack.c.h.b16 %v2068
        %v2205 = vunpack.c.l.b16 %v2069
        %v2206 = vunpack.c.h.b16 %v2069
        %v2207 = vunpack.c.l.b16 %v2070
        %v2208 = vunpack.c.h.b16 %v2070
        %v2209 = vunpack.c.l.b16 %v2071
        %v2210 = vunpack.c.h.b16 %v2071
        %v2211 = vunpack.c.l.b16 %v2072
        %v2212 = vunpack.c.h.b16 %v2072
        %v2213 = vunpack.c.l.b16 %v2073
        %v2214 = vunpack.c.h.b16 %v2073
        %v2215 = vunpack.c.l.b16 %v2074
        %v2216 = vunpack.c.h.b16 %v2074
        %v2217 = vunpack.c.l.b16 %v2075
        %v2218 = vunpack.c.h.b16 %v2075
        %v2219 = vunpack.c.l.b16 %v2076
        %v2220 = vunpack.c.h.b16 %v2076
        %v2221 = vunpack.c.l.b16 %v2077
        %v2222 = vunpack.c.h.b16 %v2077
        %v2223 = vunpack.c.l.b16 %v2078
        %v2224 = vunpack.c.h.b16 %v2078
        %v2225 = vunpack.c.l.b16 %v2079
        %v2226 = vunpack.c.h.b16 %v2079
        %v2227 = vunpack.c.l.b16 %v2080
        %v2228 = vunpack.c.h.b16 %v2080
        %v2229 = vunpack.c.l.b16 %v2081
        %v2230 = vunpack.c.h.b16 %v2081
        %v2231 = vunpack.c.l.b16 %v2082
        %v2232 = vunpack.c.h.b16 %v2082
        %v2233 = vunpack.c.l.b16 %v2083
        %v2234 = vunpack.c.h.b16 %v2083
        %v2235 = vunpack.c.l.b16 %v2084
        %v2236 = vunpack.c.h.b16 %v2084
        %v2237 = vunpack.c.l.b16 %v2085
        %v2238 = vunpack.c.h.b16 %v2085
        %v2239 = vunpack.c.l.b16 %v2086
        %v2240 = vunpack.c.h.b16 %v2086
        %v2241 = vunpack.c.l.b16 %v2087
        %v2242 = vunpack.c.h.b16 %v2087
        %v2243 = vunpack.c.l.b16 %v2088
        %v2244 = vunpack.c.h.b16 %v2088
        %v2245 = vunpack.c.l.b16 %v2089
        %v2246 = vunpack.c.h.b16 %v2089
        %v2247 = vunpack.c.l.b16 %v2090
        %v2248 = vunpack.c.h.b16 %v2090
        %v2249 = vunpack.c.l.b16 %v2091
        %v2250 = vunpack.c.h.b16 %v2091
        %v2251 = vunpack.c.l.b16 %v2092
        %v2252 = vunpack.c.h.b16 %v2092
        %v2253 = vunpack.c.l.b16 %v2093
        %v2254 = vunpack.c.h.b16 %v2093
        %v2255 = vunpack.c.l.b16 %v2094
        %v2256 = vunpack.c.h.b16 %v2094
        %v2257 = vunpack.c.l.b16 %v2095
        %v2258 = vunpack.c.h.b16 %v2095
        %v2259 = vunpack.c.l.b16 %v2096
        %v2260 = vunpack.c.h.b16 %v2096
        %v2261 = vunpack.c.l.b16 %v2097
        %v2262 = vunpack.c.h.b16 %v2097
        %v2263 = vunpack.c.l.b16 %v2098
        %v2264 = vunpack.c.h.b16 %v2098
        %v2265 = vunpack.c.l.b16 %v2099
        %v2266 = vunpack.c.h.b16 %v2099
        %v2267 = vunpack.c.l.b16 %v2100
        %v2268 = vunpack.c.h.b16 %v2100
        %v2269 = vunpack.c.l.b16 %v2101
        %v2270 = vunpack.c.h.b16 %v2101
        %v2271 = vunpack.c.l.b16 %v2102
        %v2272 = vunpack.c.h.b16 %v2102
        %v2273 = vunpack.c.l.b16 %v2103
        %v2274 = vunpack.c.h.b16 %v2103
        %v2275 = vunpack.c.l.b16 %v2104
        %v2276 = vunpack.c.h.b16 %v2104
        %v2277 = vunpack.c.l.b16 %v2105
        %v2278 = vunpack.c.h.b16 %v2105
        %v2279 = vunpack.c.l.b16 %v2106
        %v2280 = vunpack.c.h.b16 %v2106
        %v2281 = vunpack.c.l.b16 %v2107
        %v2282 = vunpack.c.h.b16 %v2107
        %v2283 = vunpack.c.l.b16 %v2108
        %v2284 = vunpack.c.h.b16 %v2108
        %v2285 = vunpack.c.l.b16 %v2109
        %v2286 = vunpack.c.h.b16 %v2109
        %v2287 = vunpack.c.l.b16 %v2110
        %v2288 = vunpack.c.h.b16 %v2110
        %v2289 = vunpack.c.l.b16 %v2111
        %v2290 = vunpack.c.h.b16 %v2111
        %v2291 = vunpack.c.l.b16 %v2112
        %v2292 = vunpack.c.h.b16 %v2112
        %v2293 = vunpack.c.l.b16 %v2113
        %v2294 = vunpack.c.h.b16 %v2113
        %v2295 = vunpack.c.l.b16 %v2114
        %v2296 = vunpack.c.h.b16 %v2114
        %v2297 = vunpack.c.l.b16 %v2115
        %v2298 = vunpack.c.h.b16 %v2115
        %v2299 = vunpack.c.l.b16 %v2116
        %v2300 = vunpack.c.h.b16 %v2116
        %v2301 = vunpack.c.l.b16 %v2117
        %v2302 = vunpack.c.h.b16 %v2117
        %v2303 = vunpack.c.l.b16 %v2118
        %v2304 = vunpack.c.h.b16 %v2118
        %v2305 = vunpack.c.l.b16 %v2119
        %v2306 = vunpack.c.h.b16 %v2119
        %v2307 = vunpack.c.l.b16 %v2120
        %v2308 = vunpack.c.h.b16 %v2120
        %v2309 = vunpack.c.l.b16 %v2121
        %v2310 = vunpack.c.h.b16 %v2121
        %v2311 = vunpack.c.l.b16 %v2122
        %v2312 = vunpack.c.h.b16 %v2122
        %v2313 = vunpack.c.l.b16 %v2123
        %v2314 = vunpack.c.h.b16 %v2123
        %v2315 = vunpack.c.l.b16 %v2124
        %v2316 = vunpack.c.h.b16 %v2124
        %v2317 = vpack.c.b16 %v2189, %v2189
        %v2318 = vpack.c.b16 %v2190, %v2190
        %v2319 = vpack.c.b16 %v2191, %v2191
        %v2320 = vpack.c.b16 %v2192, %v2192
        %v2321 = vpack.c.b16 %v2193, %v2193
        %v2322 = vpack.c.b16 %v2194, %v2194
        %v2323 = vpack.c.b16 %v2195, %v2195
        %v2324 = vpack.c.b16 %v2196, %v2196
        %v2325 = vpack.c.b16 %v2197, %v2197
        %v2326 = vpack.c.b16 %v2198, %v2198
        %v2327 = vpack.c.b16 %v2199, %v2199
        %v2328 = vpack.c.b16 %v2200, %v2200
        %v2329 = vpack.c.b16 %v2201, %v2201
        %v2330 = vpack.c.b16 %v2202, %v2202
        %v2331 = vpack.c.b16 %v2203, %v2203
        %v2332 = vpack.c.b16 %v2204, %v2204
        %v2333 = vpack.c.b16 %v2205, %v2205
        %v2334 = vpack.c.b16 %v2206, %v2206
        %v2335 = vpack.c.b16 %v2207, %v2207
        %v2336 = vpack.c.b16 %v2208, %v2208
        %v2337 = vpack.c.b16 %v2209, %v2209
        %v2338 = vpack.c.b16 %v2210, %v2210
        %v2339 = vpack.c.b16 %v2211, %v2211
        %v2340 = vpack.c.b16 %v2212, %v2212
        %v2341 = vpack.c.b16 %v2213, %v2213
        %v2342 = vpack.c.b16 %v2214, %v2214
        %v2343 = vpack.c.b16 %v2215, %v2215
        %v2344 = vpack.c.b16 %v2216, %v2216
        %v2345 = vpack.c.b16 %v2217, %v2217
        %v2346 = vpack.c.b16 %v2218, %v2218
        %v2347 = vpack.c.b16 %v2219, %v2219
        %v2348 = vpack.c.b16 %v2220, %v2220
        %v2349 = vpack.c.b16 %v2221, %v2221
        %v2350 = vpack.c.b16 %v2222, %v2222
        %v2351 = vpack.c.b16 %v2223, %v2223
        %v2352 = vpack.c.b16 %v2224, %v2224
        %v2353 = vpack.c.b16 %v2225, %v2225
        %v2354 = vpack.c.b16 %v2226, %v2226
        %v2355 = vpack.c.b16 %v2227, %v2227
        %v2356 = vpack.c.b16 %v2228, %v2228
        %v2357 = vpack.c.b16 %v2229, %v2229
        %v2358 = vpack.c.b16 %v2230, %v2230
        %v2359 = vpack.c.b16 %v2231, %v2231
        %v2360 = vpack.c.b16 %v2232, %v2232
        %v2361 = vpack.c.b16 %v2233, %v2233
        %v2362 = vpack.c.b16 %v2234, %v2234
        %v2363 = vpack.c.b16 %v2235, %v2235
        %v2364 = vpack.c.b16 %v2236, %v2236
        %v2365 = vpack.c.b16 %v2237, %v2237
        %v2366 = vpack.c.b16 %v2238, %v2238
        %v2367 = vpack.c.b16 %v2239, %v2239
        %v2368 = vpack.c.b16 %v2240, %v2240
        %v2369 = vpack.c.b16 %v2241, %v2241
        %v2370 = vpack.c.b16 %v2242, %v2242
        %v2371 = vpack.c.b16 %v2243, %v2243
        %v2372 = vpack.c.b16 %v2244, %v2244
        %v2373 = vpack.c.b16 %v2245, %v2245
        %v2374 = vpack.c.b16 %v2246, %v2246
        %v2375 = vpack.c.b16 %v2247, %v2247
        %v2376 = vpack.c.b16 %v2248, %v2248
        %v2377 = vpack.c.b16 %v2249, %v2249
        %v2378 = vpack.c.b16 %v2250, %v2250
        %v2379 = vpack.c.b16 %v2251, %v2251
        %v2380 = vpack.c.b16 %v2252, %v2252
        %v2381 = vpack.c.b16 %v2253, %v2253
        %v2382 = vpack.c.b16 %v2254, %v2254
        %v2383 = vpack.c.b16 %v2255, %v2255
        %v2384 = vpack.c.b16 %v2256, %v2256
        %v2385 = vpack.c.b16 %v2257, %v2257
        %v2386 = vpack.c.b16 %v2258, %v2258
        %v2387 = vpack.c.b16 %v2259, %v2259
        %v2388 = vpack.c.b16 %v2260, %v2260
        %v2389 = vpack.c.b16 %v2261, %v2261
        %v2390 = vpack.c.b16 %v2262, %v2262
        %v2391 = vpack.c.b16 %v2263, %v2263
        %v2392 = vpack.c.b16 %v2264, %v2264
        %v2393 = vpack.c.b16 %v2265, %v2265
        %v2394 = vpack.c.b16 %v2266, %v2266
        %v2395 = vpack.c.b16 %v2267, %v2267
        %v2396 = vpack.c.b16 %v2268, %v2268
        %v2397 = vpack.c.b16 %v2269, %v2269
        %v2398 = vpack.c.b16 %v2270, %v2270
        %v2399 = vpack.c.b16 %v2271, %v2271
        %v2400 = vpack.c.b16 %v2272, %v2272
        %v2401 = vpack.c.b16 %v2273, %v2273
        %v2402 = vpack.c.b16 %v2274, %v2274
        %v2403 = vpack.c.b16 %v2275, %v2275
        %v2404 = vpack.c.b16 %v2276, %v2276
        %v2405 = vpack.c.b16 %v2277, %v2277
        %v2406 = vpack.c.b16 %v2278, %v2278
        %v2407 = vpack.c.b16 %v2279, %v2279
        %v2408 = vpack.c.b16 %v2280, %v2280
        %v2409 = vpack.c.b16 %v2281, %v2281
        %v2410 = vpack.c.b16 %v2282, %v2282
        %v2411 = vpack.c.b16 %v2283, %v2283
        %v2412 = vpack.c.b16 %v2284, %v2284
        %v2413 = vpack.c.b16 %v2285, %v2285
        %v2414 = vpack.c.b16 %v2286, %v2286
        %v2415 = vpack.c.b16 %v2287, %v2287
        %v2416 = vpack.c.b16 %v2288, %v2288
        %v2417 = vpack.c.b16 %v2289, %v2289
        %v2418 = vpack.c.b16 %v2290, %v2290
        %v2419 = vpack.c.b16 %v2291, %v2291
        %v2420 = vpack.c.b16 %v2292, %v2292
        %v2421 = vpack.c.b16 %v2293, %v2293
        %v2422 = vpack.c.b16 %v2294, %v2294
        %v2423 = vpack.c.b16 %v2295, %v2295
        %v2424 = vpack.c.b16 %v2296, %v2296
        %v2425 = vpack.c.b16 %v2297, %v2297
        %v2426 = vpack.c.b16 %v2298, %v2298
        %v2427 = vpack.c.b16 %v2299, %v2299
        %v2428 = vpack.c.b16 %v2300, %v2300
        %v2429 = vpack.c.b16 %v2301, %v2301
        %v2430 = vpack.c.b16 %v2302, %v2302
        %v2431 = vpack.c.b16 %v2303, %v2303
        %v2432 = vpack.c.b16 %v2304, %v2304
        %v2433 = vpack.c.b16 %v2305, %v2305
        %v2434 = vpack.c.b16 %v2306, %v2306
        %v2435 = vpack.c.b16 %v2307, %v2307
        %v2436 = vpack.c.b16 %v2308, %v2308
        %v2437 = vpack.c.b16 %v2309, %v2309
        %v2438 = vpack.c.b16 %v2310, %v2310
        %v2439 = vpack.c.b16 %v2311, %v2311
        %v2440 = vpack.c.b16 %v2312, %v2312
        %v2441 = vpack.c.b16 %v2313, %v2313
        %v2442 = vpack.c.b16 %v2314, %v2314
        %v2443 = vpack.c.b16 %v2315, %v2315
        %v2444 = vpack.c.b16 %v2316, %v2316
        %vm2573 = vcmask 519168
        %2574 = vst.msk [vmem:[%s219] sm:$0xf] %vm2573, %v2317
        %2575 = vst.msk [vmem:[%s219 + $0x4] sm:$0xf] %vm2573, %v2318
        %2576 = vst.msk [vmem:[%s219 + $0x8] sm:$0xf] %vm2573, %v2319
        %2577 = vst.msk [vmem:[%s219 + $0xc] sm:$0xf] %vm2573, %v2320
        %2578 = vst.msk [vmem:[%s219 + $0x10] sm:$0xf] %vm2573, %v2321
        %2579 = vst.msk [vmem:[%s219 + $0x14] sm:$0xf] %vm2573, %v2322
        %2580 = vst.msk [vmem:[%s219 + $0x18] sm:$0xf] %vm2573, %v2323
        %2581 = vst.msk [vmem:[%s219 + $0x1c] sm:$0xf] %vm2573, %v2324
        %2582 = vst.msk [vmem:[%s219 + $0x20] sm:$0xf] %vm2573, %v2325
        %2583 = vst.msk [vmem:[%s219 + $0x24] sm:$0xf] %vm2573, %v2326
        %2584 = vst.msk [vmem:[%s219 + $0x28] sm:$0xf] %vm2573, %v2327
        %2585 = vst.msk [vmem:[%s219 + $0x2c] sm:$0xf] %vm2573, %v2328
        %2586 = vst.msk [vmem:[%s219 + $0x30] sm:$0xf] %vm2573, %v2329
        %2587 = vst.msk [vmem:[%s219 + $0x34] sm:$0xf] %vm2573, %v2330
        %2588 = vst.msk [vmem:[%s219 + $0x38] sm:$0xf] %vm2573, %v2331
        %2589 = vst.msk [vmem:[%s219 + $0x3c] sm:$0xf] %vm2573, %v2332
        %2590 = vst.msk [vmem:[%s219 + $0x40] sm:$0xf] %vm2573, %v2333
        %2591 = vst.msk [vmem:[%s219 + $0x44] sm:$0xf] %vm2573, %v2334
        %2592 = vst.msk [vmem:[%s219 + $0x48] sm:$0xf] %vm2573, %v2335
        %2593 = vst.msk [vmem:[%s219 + $0x4c] sm:$0xf] %vm2573, %v2336
        %2594 = vst.msk [vmem:[%s219 + $0x50] sm:$0xf] %vm2573, %v2337
        %2595 = vst.msk [vmem:[%s219 + $0x54] sm:$0xf] %vm2573, %v2338
        %2596 = vst.msk [vmem:[%s219 + $0x58] sm:$0xf] %vm2573, %v2339
        %2597 = vst.msk [vmem:[%s219 + $0x5c] sm:$0xf] %vm2573, %v2340
        %2598 = vst.msk [vmem:[%s219 + $0x60] sm:$0xf] %vm2573, %v2341
        %2599 = vst.msk [vmem:[%s219 + $0x64] sm:$0xf] %vm2573, %v2342
        %2600 = vst.msk [vmem:[%s219 + $0x68] sm:$0xf] %vm2573, %v2343
        %2601 = vst.msk [vmem:[%s219 + $0x6c] sm:$0xf] %vm2573, %v2344
        %2602 = vst.msk [vmem:[%s219 + $0x70] sm:$0xf] %vm2573, %v2345
        %2603 = vst.msk [vmem:[%s219 + $0x74] sm:$0xf] %vm2573, %v2346
        %2604 = vst.msk [vmem:[%s219 + $0x78] sm:$0xf] %vm2573, %v2347
        %2605 = vst.msk [vmem:[%s219 + $0x7c] sm:$0xf] %vm2573, %v2348
        %2606 = vst.msk [vmem:[%s219 + $0x80] sm:$0xf] %vm2573, %v2349
        %2607 = vst.msk [vmem:[%s219 + $0x84] sm:$0xf] %vm2573, %v2350
        %2608 = vst.msk [vmem:[%s219 + $0x88] sm:$0xf] %vm2573, %v2351
        %2609 = vst.msk [vmem:[%s219 + $0x8c] sm:$0xf] %vm2573, %v2352
        %2610 = vst.msk [vmem:[%s219 + $0x90] sm:$0xf] %vm2573, %v2353
        %2611 = vst.msk [vmem:[%s219 + $0x94] sm:$0xf] %vm2573, %v2354
        %2612 = vst.msk [vmem:[%s219 + $0x98] sm:$0xf] %vm2573, %v2355
        %2613 = vst.msk [vmem:[%s219 + $0x9c] sm:$0xf] %vm2573, %v2356
        %2614 = vst.msk [vmem:[%s219 + $0xa0] sm:$0xf] %vm2573, %v2357
        %2615 = vst.msk [vmem:[%s219 + $0xa4] sm:$0xf] %vm2573, %v2358
        %2616 = vst.msk [vmem:[%s219 + $0xa8] sm:$0xf] %vm2573, %v2359
        %2617 = vst.msk [vmem:[%s219 + $0xac] sm:$0xf] %vm2573, %v2360
        %2618 = vst.msk [vmem:[%s219 + $0xb0] sm:$0xf] %vm2573, %v2361
        %2619 = vst.msk [vmem:[%s219 + $0xb4] sm:$0xf] %vm2573, %v2362
        %2620 = vst.msk [vmem:[%s219 + $0xb8] sm:$0xf] %vm2573, %v2363
        %2621 = vst.msk [vmem:[%s219 + $0xbc] sm:$0xf] %vm2573, %v2364
        %2622 = vst.msk [vmem:[%s219 + $0xc0] sm:$0xf] %vm2573, %v2365
        %2623 = vst.msk [vmem:[%s219 + $0xc4] sm:$0xf] %vm2573, %v2366
        %2624 = vst.msk [vmem:[%s219 + $0xc8] sm:$0xf] %vm2573, %v2367
        %2625 = vst.msk [vmem:[%s219 + $0xcc] sm:$0xf] %vm2573, %v2368
        %2626 = vst.msk [vmem:[%s219 + $0xd0] sm:$0xf] %vm2573, %v2369
        %2627 = vst.msk [vmem:[%s219 + $0xd4] sm:$0xf] %vm2573, %v2370
        %2628 = vst.msk [vmem:[%s219 + $0xd8] sm:$0xf] %vm2573, %v2371
        %2629 = vst.msk [vmem:[%s219 + $0xdc] sm:$0xf] %vm2573, %v2372
        %2630 = vst.msk [vmem:[%s219 + $0xe0] sm:$0xf] %vm2573, %v2373
        %2631 = vst.msk [vmem:[%s219 + $0xe4] sm:$0xf] %vm2573, %v2374
        %2632 = vst.msk [vmem:[%s219 + $0xe8] sm:$0xf] %vm2573, %v2375
        %2633 = vst.msk [vmem:[%s219 + $0xec] sm:$0xf] %vm2573, %v2376
        %2634 = vst.msk [vmem:[%s219 + $0xf0] sm:$0xf] %vm2573, %v2377
        %2635 = vst.msk [vmem:[%s219 + $0xf4] sm:$0xf] %vm2573, %v2378
        %2636 = vst.msk [vmem:[%s219 + $0xf8] sm:$0xf] %vm2573, %v2379
        %2637 = vst.msk [vmem:[%s219 + $0xfc] sm:$0xf] %vm2573, %v2380
        %2638 = vst.msk [vmem:[%s219 + $0x100] sm:$0xf] %vm2573, %v2381
        %2639 = vst.msk [vmem:[%s219 + $0x104] sm:$0xf] %vm2573, %v2382
        %2640 = vst.msk [vmem:[%s219 + $0x108] sm:$0xf] %vm2573, %v2383
        %2641 = vst.msk [vmem:[%s219 + $0x10c] sm:$0xf] %vm2573, %v2384
        %2642 = vst.msk [vmem:[%s219 + $0x110] sm:$0xf] %vm2573, %v2385
        %2643 = vst.msk [vmem:[%s219 + $0x114] sm:$0xf] %vm2573, %v2386
        %2644 = vst.msk [vmem:[%s219 + $0x118] sm:$0xf] %vm2573, %v2387
        %2645 = vst.msk [vmem:[%s219 + $0x11c] sm:$0xf] %vm2573, %v2388
        %2646 = vst.msk [vmem:[%s219 + $0x120] sm:$0xf] %vm2573, %v2389
        %2647 = vst.msk [vmem:[%s219 + $0x124] sm:$0xf] %vm2573, %v2390
        %2648 = vst.msk [vmem:[%s219 + $0x128] sm:$0xf] %vm2573, %v2391
        %2649 = vst.msk [vmem:[%s219 + $0x12c] sm:$0xf] %vm2573, %v2392
        %2650 = vst.msk [vmem:[%s219 + $0x130] sm:$0xf] %vm2573, %v2393
        %2651 = vst.msk [vmem:[%s219 + $0x134] sm:$0xf] %vm2573, %v2394
        %2652 = vst.msk [vmem:[%s219 + $0x138] sm:$0xf] %vm2573, %v2395
        %2653 = vst.msk [vmem:[%s219 + $0x13c] sm:$0xf] %vm2573, %v2396
        %2654 = vst.msk [vmem:[%s219 + $0x140] sm:$0xf] %vm2573, %v2397
        %2655 = vst.msk [vmem:[%s219 + $0x144] sm:$0xf] %vm2573, %v2398
        %2656 = vst.msk [vmem:[%s219 + $0x148] sm:$0xf] %vm2573, %v2399
        %2657 = vst.msk [vmem:[%s219 + $0x14c] sm:$0xf] %vm2573, %v2400
        %2658 = vst.msk [vmem:[%s219 + $0x150] sm:$0xf] %vm2573, %v2401
        %2659 = vst.msk [vmem:[%s219 + $0x154] sm:$0xf] %vm2573, %v2402
        %2660 = vst.msk [vmem:[%s219 + $0x158] sm:$0xf] %vm2573, %v2403
        %2661 = vst.msk [vmem:[%s219 + $0x15c] sm:$0xf] %vm2573, %v2404
        %2662 = vst.msk [vmem:[%s219 + $0x160] sm:$0xf] %vm2573, %v2405
        %2663 = vst.msk [vmem:[%s219 + $0x164] sm:$0xf] %vm2573, %v2406
        %2664 = vst.msk [vmem:[%s219 + $0x168] sm:$0xf] %vm2573, %v2407
        %2665 = vst.msk [vmem:[%s219 + $0x16c] sm:$0xf] %vm2573, %v2408
        %2666 = vst.msk [vmem:[%s219 + $0x170] sm:$0xf] %vm2573, %v2409
        %2667 = vst.msk [vmem:[%s219 + $0x174] sm:$0xf] %vm2573, %v2410
        %2668 = vst.msk [vmem:[%s219 + $0x178] sm:$0xf] %vm2573, %v2411
        %2669 = vst.msk [vmem:[%s219 + $0x17c] sm:$0xf] %vm2573, %v2412
        %2670 = vst.msk [vmem:[%s219 + $0x180] sm:$0xf] %vm2573, %v2413
        %2671 = vst.msk [vmem:[%s219 + $0x184] sm:$0xf] %vm2573, %v2414
        %2672 = vst.msk [vmem:[%s219 + $0x188] sm:$0xf] %vm2573, %v2415
        %2673 = vst.msk [vmem:[%s219 + $0x18c] sm:$0xf] %vm2573, %v2416
        %2674 = vst.msk [vmem:[%s219 + $0x190] sm:$0xf] %vm2573, %v2417
        %2675 = vst.msk [vmem:[%s219 + $0x194] sm:$0xf] %vm2573, %v2418
        %2676 = vst.msk [vmem:[%s219 + $0x198] sm:$0xf] %vm2573, %v2419
        %2677 = vst.msk [vmem:[%s219 + $0x19c] sm:$0xf] %vm2573, %v2420
        %2678 = vst.msk [vmem:[%s219 + $0x1a0] sm:$0xf] %vm2573, %v2421
        %2679 = vst.msk [vmem:[%s219 + $0x1a4] sm:$0xf] %vm2573, %v2422
        %2680 = vst.msk [vmem:[%s219 + $0x1a8] sm:$0xf] %vm2573, %v2423
        %2681 = vst.msk [vmem:[%s219 + $0x1ac] sm:$0xf] %vm2573, %v2424
        %2682 = vst.msk [vmem:[%s219 + $0x1b0] sm:$0xf] %vm2573, %v2425
        %2683 = vst.msk [vmem:[%s219 + $0x1b4] sm:$0xf] %vm2573, %v2426
        %2684 = vst.msk [vmem:[%s219 + $0x1b8] sm:$0xf] %vm2573, %v2427
        %2685 = vst.msk [vmem:[%s219 + $0x1bc] sm:$0xf] %vm2573, %v2428
        %2686 = vst.msk [vmem:[%s219 + $0x1c0] sm:$0xf] %vm2573, %v2429
        %2687 = vst.msk [vmem:[%s219 + $0x1c4] sm:$0xf] %vm2573, %v2430
        %2688 = vst.msk [vmem:[%s219 + $0x1c8] sm:$0xf] %vm2573, %v2431
        %2689 = vst.msk [vmem:[%s219 + $0x1cc] sm:$0xf] %vm2573, %v2432
        %2690 = vst.msk [vmem:[%s219 + $0x1d0] sm:$0xf] %vm2573, %v2433
        %2691 = vst.msk [vmem:[%s219 + $0x1d4] sm:$0xf] %vm2573, %v2434
        %2692 = vst.msk [vmem:[%s219 + $0x1d8] sm:$0xf] %vm2573, %v2435
        %2693 = vst.msk [vmem:[%s219 + $0x1dc] sm:$0xf] %vm2573, %v2436
        %2694 = vst.msk [vmem:[%s219 + $0x1e0] sm:$0xf] %vm2573, %v2437
        %2695 = vst.msk [vmem:[%s219 + $0x1e4] sm:$0xf] %vm2573, %v2438
        %2696 = vst.msk [vmem:[%s219 + $0x1e8] sm:$0xf] %vm2573, %v2439
        %2697 = vst.msk [vmem:[%s219 + $0x1ec] sm:$0xf] %vm2573, %v2440
        %2698 = vst.msk [vmem:[%s219 + $0x1f0] sm:$0xf] %vm2573, %v2441
        %2699 = vst.msk [vmem:[%s219 + $0x1f4] sm:$0xf] %vm2573, %v2442
        %2700 = vst.msk [vmem:[%s219 + $0x1f8] sm:$0xf] %vm2573, %v2443
        %2701 = vst.msk [vmem:[%s219 + $0x1fc] sm:$0xf] %vm2573, %v2444
        %s2702 = smul.u32 128, %s18
        %p2703 = scmp.lt.s32.totalorder %s2702, 255
        %s2704 = scalar_select %p2703, %s2702, 255
        %s2705 = smul.addr %s2704, 4
        %s2706 = scalar_lea.vmem %s4, %s2705
        // Predicated region
        $region41: #{tpu_custom_call.1} parent=35 // pred_check
          %p2707 = pneg %p125
        $region42: #{tpu_custom_call.1} parent=35 // pred_check_branch
          %2709 = sbr.rel (%p2707) target = $region44
        $region43: #{tpu_custom_call.1} parent=35 // pred_region
          %s2710 = smul.u32 128, %s18
        $region44: #{tpu_custom_call.1} parent=35 // pred_fallthru
          _
      $region36: #{tpu_custom_call.1} parent=5 // pred_fallthru
        _
      %p2711 = scmp.le.s32.totalorder 2, %s13
      // Predicated region
      $region45: #{tpu_custom_call.1} parent=5 // pred_check
        %p2712 = pneg %p2711
      $region46: #{tpu_custom_call.1} parent=5 // pred_check_branch
        %2714 = sbr.rel (%p2712) target = $region48
      $region47: #{tpu_custom_call.1} parent=5 // pred_region
        %s2715 = ssub.s32 %s13, 2
        // Predicated region
        $region49: #{tpu_custom_call.1} parent=47 // pred_check
          %p2716 = pneg %p131
        $region50: #{tpu_custom_call.1} parent=47 // pred_check_branch
          %2718 = sbr.rel (%p2716) target = $region52
        $region51: #{tpu_custom_call.1} parent=47 // pred_region
          %s2719 = smul.u32 128, %s19
          %p2720 = scmp.lt.s32.totalorder %s2719, 255
          %s2721 = scalar_select %p2720, %s2719, 255
          %s2722 = smul.addr %s2721, 4
          %s2723 = scalar_lea.vmem %s4, %s2722
        $region52: #{tpu_custom_call.1} parent=47 // pred_fallthru
          _
      $region48: #{tpu_custom_call.1} parent=5 // pred_fallthru
        _
    $region6: #{tpu_custom_call.1} parent=1 // loop_footer
      %s17 = sadd.s32 1, %s13
    $region7: #{tpu_custom_call.1} parent=1 // loop_footer_branch
      %12 = sbr.rel target = $region3
    $region8: #{tpu_custom_call.1} parent=1 // loop_exit
      _
    %2724 = vsyncpa [#allocation3], 1
    %s2725 = scalar_lea.sflag [#allocation3], 1
    %2726 = vsyncpa %s2725, 1

</llo_original>
